<compile_context>
chip_gen: v6e
topology: v6e:2x2x1
jax: 0.10.0
libtpu: 0.0.40
codegen_flags: <defaults>
</compile_context>

<pallas_src>
import functools

import jax
import jax.numpy as jnp
from jax import lax
from jax.experimental import pallas as pl
from jax.experimental.pallas import tpu as pltpu

# Static dims implied by the module (Linear expects 32 * 101 features).
C1 = 32                                  # conv channels
K1W = 13                                 # conv1 kernel (1, 13)
K2H = 2                                  # conv2 kernel (2, 1) -> input H must be 2
POOL_K = 35
POOL_S = 7
W_POOL = 101                             # fixed by Linear(32*101, 2)
W_CONV = (W_POOL - 1) * POOL_S + POOL_K  # 735
W_IN = W_CONV + K1W - 1                  # 747
H_IN = 2
N_CLASSES = 2
BN_EPS = 1e-5
N_TAPS = K2H * K1W                       # 26 fused FIR taps
W_PAD = 768                              # 735 -> 6*128 lane-aligned conv width
WP_PAD = 128                             # 101 -> 128 lane-aligned pooled width


def _shallow_convnet_kernel(xs_ref, wblk_ref, bstk_ref, pool_ref,
                            wl_ref, group_ref, bl_ref, out_ref):
    """One batch tile of B elements per grid step; all heavy ops on the MXU.

    xs_ref:    (B*26, 768)    im2col slab: row b*26 + h*13 + k = x[b, h, k:k+735]
    wblk_ref:  (B*32, B*26)   block-diagonal fused conv1*conv2*BN weights
    bstk_ref:  (B*32, 1)      fused bias (conv biases + BN shift), tiled per batch
    pool_ref:  (768, 128)     average-pool matrix (padded rows/cols are zero)
    wl_ref:    (2, B*32, 128) linear weight tiled per batch (padded cols zero)
    group_ref: (B, B*32)      per-element channel-group selector
    bl_ref:    (1, 2)         linear bias
    out_ref:   (1, B, 2)      output block
    """
    # Conv2d(1,32,(1,13)) + Conv2d(32,32,(2,1)) + BatchNorm2d fused into one
    # block-diagonal MXU matmul over the pre-shifted input slab.
    z = jnp.dot(wblk_ref[...], xs_ref[...],
                preferred_element_type=jnp.float32)            # (B*32, 768)
    z = z + bstk_ref[...]
    z = z * z                                                  # torch.square

    # AvgPool2d((1,35),(1,7)) as one MXU matmul; padded rows/cols contribute 0.
    pooled = jnp.dot(z, pool_ref[...],
                     preferred_element_type=jnp.float32)       # (B*32, 128)
    # Clamp so the zero padding columns give a finite log that the zero-padded
    # linear-weight columns multiply away exactly (no -inf * 0 = NaN).
    lp = jnp.log(jnp.maximum(pooled, 1e-30))                   # (B*32, 128)

    # Dropout = identity (inference). Flatten + Linear(32*101, 2): per-class
    # lane reduction, then a tiny group matmul collapses the 32 channels of
    # each batch element (no (2,32,101) broadcast temporary).
    s0 = jnp.sum(lp * wl_ref[0], axis=1, keepdims=True)        # (B*32, 1)
    s1 = jnp.sum(lp * wl_ref[1], axis=1, keepdims=True)        # (B*32, 1)
    s = jnp.concatenate([s0, s1], axis=1)                      # (B*32, 2)
    y = jnp.dot(group_ref[...], s,
                preferred_element_type=jnp.float32)            # (B, 2)
    out_ref[0] = y + bl_ref[...]


@functools.partial(jax.jit, static_argnames=("block_b",))
def shallow_convnet_forward(x, params, block_b=None):
    (w1, b1, w2, b2, gamma, beta, run_mean, run_var, wl, bl) = params
    n = x.shape[0]

    # Batch tile: B*26 rows must stay a sublane multiple -> B in {4, 8, ...}.
    # Prefer M=256 (B=8) when the batch still yields >= 2 grid steps (keeps
    # both v7x TensorCores busy); otherwise B=4 (M=128 fills a v5e MXU pass).
    if block_b is None:
        block_b = 8 if (n + 7) // 8 >= 2 else 4
    B = block_b

    # --- Fold conv1 + conv2 + BatchNorm (inference) into one 26-tap FIR.
    #     Pure wrapper math, runs once under jit, tiny.
    inv_std = 1.0 / jnp.sqrt(run_var + BN_EPS)
    bn_scale = gamma * inv_std                                   # (32,)
    bn_shift = beta - run_mean * bn_scale                        # (32,)

    w1_2d = w1.reshape(C1, K1W)                                  # (32, 13)
    w2_h = jnp.transpose(w2[:, :, :, 0], (2, 0, 1))              # (h, out, in)
    w_comb = jnp.einsum('hoc,ck->hok', w2_h, w1_2d)              # (2, 32, 13)
    b_comb = jnp.einsum('hoc,c->o', w2_h, b1) + b2               # (32,)

    # Tap layout MUST be w_eff[o, h*13 + k]: transpose (h,o,k)->(o,h,k) first.
    w_eff = jnp.transpose(w_comb * bn_scale[None, :, None],
                          (1, 0, 2)).reshape(C1, N_TAPS)         # (32, 26)
    b_eff = (b_comb * bn_scale + bn_shift).reshape(C1, 1)        # (32, 1)

    # Block-diagonal weight / stacked bias for a B-element tile.
    w_blk = jnp.kron(jnp.eye(B, dtype=jnp.float32), w_eff)       # (B*32, B*26)
    b_stk = jnp.tile(b_eff, (B, 1))                              # (B*32, 1)

    # --- Pooling matrix (pool-as-matmul), lane-padded to (768, 128).
    iw = jnp.arange(W_PAD)[:, None]
    ij = jnp.arange(WP_PAD)[None, :]
    in_win = (iw >= ij * POOL_S) & (iw < ij * POOL_S + POOL_K)
    valid = (ij < W_POOL) & (iw < W_CONV)
    pool_mat = jnp.where(in_win & valid, 1.0 / POOL_K, 0.0
                         ).astype(jnp.float32)                   # (768, 128)

    # --- Linear-layer layouts (padded columns are zero -> contribute 0).
    wl_k = wl.reshape(N_CLASSES, C1, W_POOL)                     # (2, 32, 101)
    wl_k = jnp.pad(wl_k, ((0, 0), (0, 0), (0, WP_PAD - W_POOL)))
    wl_tiled = jnp.tile(wl_k, (1, B, 1))                         # (2, B*32, 128)
    bl_k = bl.reshape(1, N_CLASSES)
    group = jnp.repeat(jnp.eye(B, dtype=jnp.float32), C1, axis=1)  # (B, B*32)

    # --- Batch tiling: pad to a multiple of B (edge-replicated, sliced off).
    n_tiles = -(-n // B)
    n_pad = n_tiles * B
    x_rows = x.reshape(n, H_IN, W_IN)
    if n_pad != n:
        x_rows = jnp.concatenate(
            [x_rows, jnp.broadcast_to(x_rows[-1:], (n_pad - n, H_IN, W_IN))],
            axis=0)

    # --- im2col slab: x_shift[b*26 + h*13 + k, w] = x[b, h, w + k], lane-padded.
    tap_idx = jnp.arange(K1W)[:, None] + jnp.arange(W_CONV)[None, :]  # (13, 735)
    x_shift = x_rows[:, :, tap_idx]                              # (n_pad, 2, 13, 735)
    x_shift = x_shift.reshape(n_pad * N_TAPS, W_CONV)
    x_shift = jnp.pad(x_shift, ((0, 0), (0, W_PAD - W_CONV)))    # (n_pad*26, 768)

    out = pl.pallas_call(
        _shallow_convnet_kernel,
        out_shape=jax.ShapeDtypeStruct((n_tiles, B, N_CLASSES), jnp.float32),
        grid=(n_tiles,),
        in_specs=[
            pl.BlockSpec((B * N_TAPS, W_PAD), lambda i: (i, 0)),
            pl.BlockSpec((B * C1, B * N_TAPS), lambda i: (0, 0)),
            pl.BlockSpec((B * C1, 1), lambda i: (0, 0)),
            pl.BlockSpec((W_PAD, WP_PAD), lambda i: (0, 0)),
            pl.BlockSpec((N_CLASSES, B * C1, WP_PAD), lambda i: (0, 0, 0)),
            pl.BlockSpec((B, B * C1), lambda i: (0, 0)),
            pl.BlockSpec((1, N_CLASSES), lambda i: (0, 0)),
        ],
        out_specs=pl.BlockSpec((1, B, N_CLASSES), lambda i: (i, 0, 0)),
        compiler_params=pltpu.CompilerParams(
            dimension_semantics=("parallel",)),
    )(x_shift, w_blk, b_stk, pool_mat, wl_tiled, group, bl_k)
    return out.reshape(n_pad, N_CLASSES)[:n]                     # (N, 2)


def ref_forward(x, params):
    """Pure-JAX reference mirroring the PyTorch forward (inference mode)."""
    (w1, b1, w2, b2, gamma, beta, run_mean, run_var, wl, bl) = params
    dn = ('NCHW', 'OIHW', 'NCHW')
    y = lax.conv_general_dilated(x, w1, (1, 1), 'VALID', dimension_numbers=dn)
    y = y + b1[None, :, None, None]
    y = lax.conv_general_dilated(y, w2, (1, 1), 'VALID', dimension_numbers=dn)
    y = y + b2[None, :, None, None]
    y = (y - run_mean[None, :, None, None]) * (
        1.0 / jnp.sqrt(run_var + BN_EPS))[None, :, None, None]
    y = y * gamma[None, :, None, None] + beta[None, :, None, None]
    y = jnp.square(y)
    y = lax.reduce_window(y, 0.0, lax.add,
                          (1, 1, 1, POOL_K), (1, 1, 1, POOL_S), 'VALID') / POOL_K
    y = jnp.log(y)
    y = y.reshape(x.shape[0], -1)
    return y @ wl.T + bl


def init_params(key):
    ks = jax.random.split(key, 10)
    w1 = 0.1 * jax.random.normal(ks[0], (C1, 1, 1, K1W), jnp.float32)
    b1 = 0.1 * jax.random.normal(ks[1], (C1,), jnp.float32)
    w2 = 0.1 * jax.random.normal(ks[2], (C1, C1, K2H, 1), jnp.float32)
    b2 = 0.1 * jax.random.normal(ks[3], (C1,), jnp.float32)
    gamma = 1.0 + 0.1 * jax.random.normal(ks[4], (C1,), jnp.float32)
    beta = 0.1 * jax.random.normal(ks[5], (C1,), jnp.float32)
    run_mean = 0.05 * jax.random.normal(ks[6], (C1,), jnp.float32)
    run_var = 1.0 + 0.1 * jax.random.uniform(ks[7], (C1,), jnp.float32)
    wl = 0.1 * jax.random.normal(ks[8], (N_CLASSES, C1 * 1 * W_POOL), jnp.float32)
    bl = 0.1 * jax.random.normal(ks[9], (N_CLASSES,), jnp.float32)
    return (w1, b1, w2, b2, gamma, beta, run_mean, run_var, wl, bl)


if __name__ == "__main__":
    key = jax.random.PRNGKey(0)
    kx, kp = jax.random.split(key)
    # Shapes are pinned by the module: (batch, 1, 2, 747).  batch=8 with the
    # auto-selected tile B=4 gives 2 grid steps (both v7x TensorCores busy).
    x = jax.random.normal(kx, (8, 1, H_IN, W_IN), jnp.float32)
    params = init_params(kp)

    y = shallow_convnet_forward(x, params)
    y = jax.block_until_ready(y)

    y_ref = ref_forward(x, params)
    assert y.shape == (8, N_CLASSES), y.shape
    assert jnp.allclose(y, y_ref, atol=1e-3, rtol=1e-2), (y, y_ref)
    print("KERNEL_OK")
</pallas_src>

<mosaic_0001>
module attributes {stable_mosaic.version = 11 : i64} {
  func.func @_shallow_convnet_kernel(%arg0: i32, %arg1: memref<104x768xf32, #tpu.memory_space<vmem>>, %arg2: memref<128x104xf32, #tpu.memory_space<vmem>>, %arg3: memref<128x1xf32, #tpu.memory_space<vmem>>, %arg4: memref<768x128xf32, #tpu.memory_space<vmem>>, %arg5: memref<2x128x128xf32, #tpu.memory_space<vmem>>, %arg6: memref<4x128xf32, #tpu.memory_space<vmem>>, %arg7: memref<1x2xf32, #tpu.memory_space<vmem>>, %arg8: memref<1x4x2xf32, #tpu.memory_space<vmem>>) attributes {dimension_semantics = [#tpu.dimension_semantics<parallel>], iteration_bounds = array<i64: 2>, scalar_prefetch = 0 : i64, scratch_operands = 0 : i64, tpu.core_type = #tpu.core_type<tc>, window_params = [{transform_indices = @transform_0, window_bounds = array<i64: 104, 768>}, {pipeline_mode = #tpu.pipeline_mode<synchronous>, transform_indices = @transform_1, window_bounds = array<i64: 128, 104>}, {pipeline_mode = #tpu.pipeline_mode<synchronous>, transform_indices = @transform_2, window_bounds = array<i64: 128, 1>}, {pipeline_mode = #tpu.pipeline_mode<synchronous>, transform_indices = @transform_3, window_bounds = array<i64: 768, 128>}, {pipeline_mode = #tpu.pipeline_mode<synchronous>, transform_indices = @transform_4, window_bounds = array<i64: 2, 128, 128>}, {pipeline_mode = #tpu.pipeline_mode<synchronous>, transform_indices = @transform_5, window_bounds = array<i64: 4, 128>}, {pipeline_mode = #tpu.pipeline_mode<synchronous>, transform_indices = @transform_6, window_bounds = array<i64: 1, 2>}, {transform_indices = @transform_7, window_bounds = array<i64: 1, 4, 2>}]} {
    %c0 = arith.constant 0 : index
    %c0_0 = arith.constant 0 : index
    %0 = vector.load %arg2[%c0, %c0_0] : memref<128x104xf32, #tpu.memory_space<vmem>>, vector<128x104xf32>
    %c0_1 = arith.constant 0 : index
    %c0_2 = arith.constant 0 : index
    %1 = vector.load %arg1[%c0_1, %c0_2] : memref<104x768xf32, #tpu.memory_space<vmem>>, vector<104x768xf32>
    %cst = arith.constant dense<0.000000e+00> : vector<128x768xf32>
    %2 = tpu.matmul %0, %1, %cst {dimension_numbers = #tpu.dot_dimension_numbers<[1], [0], [0], [1], [0, 0, 1, 1], [], []>} : vector<128x104xf32>, vector<104x768xf32>, vector<128x768xf32> -> vector<128x768xf32>
    %c0_3 = arith.constant 0 : index
    %c0_4 = arith.constant 0 : index
    %3 = vector.load %arg3[%c0_3, %c0_4] : memref<128x1xf32, #tpu.memory_space<vmem>>, vector<128x1xf32>
    %4 = vector.broadcast %3 : vector<128x1xf32> to vector<128x768xf32>
    %5 = arith.addf %2, %4 : vector<128x768xf32>
    %6 = arith.mulf %5, %5 : vector<128x768xf32>
    %c0_5 = arith.constant 0 : index
    %c0_6 = arith.constant 0 : index
    %7 = vector.load %arg4[%c0_5, %c0_6] : memref<768x128xf32, #tpu.memory_space<vmem>>, vector<768x128xf32>
    %cst_7 = arith.constant dense<0.000000e+00> : vector<128x128xf32>
    %8 = tpu.matmul %6, %7, %cst_7 {dimension_numbers = #tpu.dot_dimension_numbers<[1], [0], [0], [1], [0, 0, 1, 1], [], []>} : vector<128x768xf32>, vector<768x128xf32>, vector<128x128xf32> -> vector<128x128xf32>
    %cst_8 = arith.constant 1.000000e-30 : f32
    %9 = vector.broadcast %cst_8 : f32 to vector<128x128xf32>
    %10 = arith.maximumf %8, %9 : vector<128x128xf32>
    %11 = math.log %10 : vector<128x128xf32>
    %c0_9 = arith.constant 0 : index
    %c0_10 = arith.constant 0 : index
    %c0_11 = arith.constant 0 : index
    %12 = vector.load %arg5[%c0_9, %c0_10, %c0_11] : memref<2x128x128xf32, #tpu.memory_space<vmem>>, vector<1x128x128xf32>
    %13 = vector.shape_cast %12 : vector<1x128x128xf32> to vector<128x128xf32>
    %14 = arith.mulf %11, %13 : vector<128x128xf32>
    %cst_12 = arith.constant dense<0.000000e+00> : vector<128xf32>
    %15 = vector.multi_reduction <add>, %14, %cst_12 [1] : vector<128x128xf32> to vector<128xf32>
    %16 = vector.shape_cast %15 : vector<128xf32> to vector<128x1xf32>
    %c1 = arith.constant 1 : index
    %c0_13 = arith.constant 0 : index
    %c0_14 = arith.constant 0 : index
    %17 = vector.load %arg5[%c1, %c0_13, %c0_14] : memref<2x128x128xf32, #tpu.memory_space<vmem>>, vector<1x128x128xf32>
    %18 = vector.shape_cast %17 : vector<1x128x128xf32> to vector<128x128xf32>
    %19 = arith.mulf %11, %18 : vector<128x128xf32>
    %cst_15 = arith.constant dense<0.000000e+00> : vector<128xf32>
    %20 = vector.multi_reduction <add>, %19, %cst_15 [1] : vector<128x128xf32> to vector<128xf32>
    %21 = vector.shape_cast %20 : vector<128xf32> to vector<128x1xf32>
    %22 = tpu.concatenate %16, %21 in 1 : vector<128x1xf32>, vector<128x1xf32> -> vector<128x2xf32>
    %c0_16 = arith.constant 0 : index
    %c0_17 = arith.constant 0 : index
    %23 = vector.load %arg6[%c0_16, %c0_17] : memref<4x128xf32, #tpu.memory_space<vmem>>, vector<4x128xf32>
    %cst_18 = arith.constant dense<0.000000e+00> : vector<4x2xf32>
    %24 = tpu.matmul %23, %22, %cst_18 {dimension_numbers = #tpu.dot_dimension_numbers<[1], [0], [0], [1], [0, 0, 1, 1], [], []>} : vector<4x128xf32>, vector<128x2xf32>, vector<4x2xf32> -> vector<4x2xf32>
    %c0_19 = arith.constant 0 : index
    %c0_20 = arith.constant 0 : index
    %25 = vector.load %arg7[%c0_19, %c0_20] : memref<1x2xf32, #tpu.memory_space<vmem>>, vector<1x2xf32>
    %26 = vector.broadcast %25 : vector<1x2xf32> to vector<4x2xf32>
    %27 = arith.addf %24, %26 : vector<4x2xf32>
    %c0_21 = arith.constant 0 : index
    %c0_22 = arith.constant 0 : index
    %c0_23 = arith.constant 0 : index
    %28 = vector.load %arg8[%c0_21, %c0_22, %c0_23] : memref<1x4x2xf32, #tpu.memory_space<vmem>>, vector<1x4x2xf32>
    %29 = vector.shape_cast %28 : vector<1x4x2xf32> to vector<4x2xf32>
    %30 = vector.shape_cast %27 : vector<4x2xf32> to vector<1x4x2xf32>
    tpu.vector_store %arg8[%c0_21, %c0_22, %c0_23], %30 {strides = array<i32>} : memref<1x4x2xf32, #tpu.memory_space<vmem>>, vector<1x4x2xf32>,
    return
  }
  func.func @transform_0(%arg0: i32) -> (i32, i32) {
    %c0_i32 = arith.constant 0 : i32
    %c0_i32_0 = arith.constant 0 : i32
    return %arg0, %c0_i32 : i32, i32
  }
  func.func @transform_1(%arg0: i32) -> (i32, i32) {
    %c0_i32 = arith.constant 0 : i32
    %c0_i32_0 = arith.constant 0 : i32
    %c0_i32_1 = arith.constant 0 : i32
    return %c0_i32, %c0_i32_0 : i32, i32
  }
  func.func @transform_2(%arg0: i32) -> (i32, i32) {
    %c0_i32 = arith.constant 0 : i32
    %c0_i32_0 = arith.constant 0 : i32
    %c0_i32_1 = arith.constant 0 : i32
    return %c0_i32, %c0_i32_0 : i32, i32
  }
  func.func @transform_3(%arg0: i32) -> (i32, i32) {
    %c0_i32 = arith.constant 0 : i32
    %c0_i32_0 = arith.constant 0 : i32
    %c0_i32_1 = arith.constant 0 : i32
    return %c0_i32, %c0_i32_0 : i32, i32
  }
  func.func @transform_4(%arg0: i32) -> (i32, i32, i32) {
    %c0_i32 = arith.constant 0 : i32
    %c0_i32_0 = arith.constant 0 : i32
    %c0_i32_1 = arith.constant 0 : i32
    %c0_i32_2 = arith.constant 0 : i32
    return %c0_i32, %c0_i32_0, %c0_i32_1 : i32, i32, i32
  }
  func.func @transform_5(%arg0: i32) -> (i32, i32) {
    %c0_i32 = arith.constant 0 : i32
    %c0_i32_0 = arith.constant 0 : i32
    %c0_i32_1 = arith.constant 0 : i32
    return %c0_i32, %c0_i32_0 : i32, i32
  }
  func.func @transform_6(%arg0: i32) -> (i32, i32) {
    %c0_i32 = arith.constant 0 : i32
    %c0_i32_0 = arith.constant 0 : i32
    %c0_i32_1 = arith.constant 0 : i32
    return %c0_i32, %c0_i32_0 : i32, i32
  }
  func.func @transform_7(%arg0: i32) -> (i32, i32, i32) {
    %c0_i32 = arith.constant 0 : i32
    %c0_i32_0 = arith.constant 0 : i32
    %c0_i32_1 = arith.constant 0 : i32
    return %arg0, %c0_i32, %c0_i32_0 : i32, i32, i32
  }
}

</mosaic_0001>

<llo_original>
// kernel: mul.4
$region0: #{mul.4}
  %s0 = inlined_call_operand.vmem [shape: f32[32,2,13], index: 0, kind: input, shape index: {}]
  %s1 = inlined_call_operand.vmem [shape: f32[32,26], index: 1, kind: output, shape index: {}]
  %v2 = vld [vmem:[%s0] sm:$0xff]
  %vm3 = vcmask 261120
  %4 = vst.msk [vmem:[%s1] sm:$0xff] %vm3, %v2
  %s5 = scalar_lea.vmem %s0, 8
  %v6 = vld [vmem:[%s5] sm:$0x1f]
  %vm7 = vcmask 261120
  %s8 = scalar_lea.vmem %s1, 8
  %9 = vst.msk [vmem:[%s8] sm:$0x1f] %vm7, %v6
  %s10 = scalar_lea.vmem %s0, 16
  %v11 = vld [vmem:[%s10] sm:$0xff]
  %vm12 = vcmask 261120
  %s13 = scalar_lea.vmem %s1, 13
  %14 = vst.msk [vmem:[%s13] sm:$0xff] %vm12, %v11
  %s15 = scalar_lea.vmem %s0, 24
  %v16 = vld [vmem:[%s15] sm:$0x1f]
  %vm17 = vcmask 261120
  %s18 = scalar_lea.vmem %s1, 21
  %19 = vst.msk [vmem:[%s18] sm:$0x1f] %vm17, %v16

// kernel: shallow_convnet_forward.1
$region0: #{shallow_convnet_forward.1}
  #allocation0 [shape = 'u32[]', space=smem, size = 0x4, offset = 0x4, fixed_abs, tag = 'smem constant byte address 0x4 - core index']
  #allocation1 [shape = 'u32[144,128]{1,0:T(1,128)}', space=vmem, size = 0x12000, scoped, tag = 'internal scratch']
  %s0 = inlined_call_operand.vmem [shape: f32[208,768], index: 0, kind: input, shape index: {}]
  %s1 = inlined_call_operand.vmem [shape: f32[128,104], index: 1, kind: input, shape index: {}]
  %s2 = inlined_call_operand.vmem [shape: f32[128,1], index: 2, kind: input, shape index: {}]
  %s3 = inlined_call_operand.vmem [shape: f32[768,128], index: 3, kind: input, shape index: {}]
  %s4 = inlined_call_operand.vmem [shape: f32[2,128,128], index: 4, kind: input, shape index: {}]
  %s5 = inlined_call_operand.vmem [shape: f32[4,128], index: 5, kind: input, shape index: {}]
  %s6 = inlined_call_operand.vmem [shape: f32[1,2], index: 6, kind: input, shape index: {}]
  %s7 = inlined_call_operand.vmem [shape: f32[2,4,2], index: 7, kind: output, shape index: {}]
  %s8 = sld [smem:[#allocation0]]
  $region61: #{shallow_convnet_forward.1} parent=0
    _
  %s10 = ssub.s32 1, %s8
  %s11 = scalar_select 0, %s10, %s8
  loop: start=0, step=1, limit=4
  $region2: #{shallow_convnet_forward.1} parent=0 // loop_pre_header
    _
  $region3: #{shallow_convnet_forward.1} parent=0 // loop_header
    %s13 = sphi 0, %s17
    %p14 = scmp.ge.s32.totalorder %s13, 4
    %s23 = sphi 0, %s25
    %s26 = sphi 0, %s23
    %s27 = sphi 0, %s26
    %s43 = sphi 0, %s27
    %s47 = sphi 0, %s47
    %s49 = sphi 0, %s47
    %s50 = sphi 0, %s49
    %s64 = sphi 0, %s50
    %s68 = sphi 0, %s68
    %s70 = sphi 0, %s68
    %s71 = sphi 0, %s70
    %s85 = sphi 0, %s71
    %s89 = sphi 0, %s89
    %s91 = sphi 0, %s89
    %s92 = sphi 0, %s91
    %s106 = sphi 0, %s92
    %s110 = sphi 0, %s110
    %s112 = sphi 0, %s110
    %s113 = sphi 0, %s112
    %s127 = sphi 0, %s113
    %s131 = sphi 0, %s131
    %s133 = sphi 0, %s131
    %s134 = sphi 0, %s133
    %s148 = sphi 0, %s134
    %s152 = sphi 0, %s152
    %s154 = sphi 0, %s152
    %s155 = sphi 0, %s154
    %s169 = sphi 0, %s155
    %s175 = sphi 0, %s177
    %s178 = sphi 0, %s175
    %s179 = sphi 0, %s178
    %s195 = sphi 0, %s179
  $region4: #{shallow_convnet_forward.1} parent=0 // loop_header_branch
    %16 = sbr.rel (%p14) target = $region8
  $region5: #{shallow_convnet_forward.1} parent=0 // loop_body
    %s18 = ssub.s32 %s13, 1
    %s19 = ssub.s32 %s13, 2
    %s20 = sadd.s32 %s13, 1
    %s21 = ssub.s32 %s13, %s20
    %p22 = scmp.eq.s32.totalorder %s21, 0
    %s24 = sadd.s32 %s23, 1
    %s25 = scalar_select %p22, %s23, %s24
    %p28 = pneg %p22
    %p29 = scmp.eq.s32.totalorder %s13, 1
    %p30 = por %p28, %p29
    %p31 = scmp.ne.s32.totalorder %s23, %s26
    %p32 = scmp.eq.s32.totalorder %s13, 0
    %p33 = por %p31, %p32
    %p34 = scmp.ne.s32.totalorder %s23, %s26
    %p35 = scmp.eq.s32.totalorder %s18, 1
    %p36 = por %p34, %p35
    %p37 = scmp.ne.s32.totalorder %s26, %s27
    %p38 = scmp.eq.s32.totalorder %s18, 0
    %p39 = por %p37, %p38
    %p40 = scmp.ne.s32.totalorder %s26, %s27
    %p41 = scmp.eq.s32.totalorder %s19, 1
    %p42 = por %p40, %p41
    %p44 = scmp.ne.s32.totalorder %s27, %s43
    %p45 = scmp.eq.s32.totalorder %s19, 0
    %p46 = por %p44, %p45
    %s48 = sadd.s32 %s47, 1
    %p51 = scmp.eq.s32.totalorder %s13, 1
    %p52 = scmp.ne.s32.totalorder %s47, %s49
    %p53 = scmp.eq.s32.totalorder %s13, 0
    %p54 = por %p52, %p53
    %p55 = scmp.ne.s32.totalorder %s47, %s49
    %p56 = scmp.eq.s32.totalorder %s18, 1
    %p57 = por %p55, %p56
    %p58 = scmp.ne.s32.totalorder %s49, %s50
    %p59 = scmp.eq.s32.totalorder %s18, 0
    %p60 = por %p58, %p59
    %p61 = scmp.ne.s32.totalorder %s49, %s50
    %p62 = scmp.eq.s32.totalorder %s19, 1
    %p63 = por %p61, %p62
    %p65 = scmp.ne.s32.totalorder %s50, %s64
    %p66 = scmp.eq.s32.totalorder %s19, 0
    %p67 = por %p65, %p66
    %s69 = sadd.s32 %s68, 1
    %p72 = scmp.eq.s32.totalorder %s13, 1
    %p73 = scmp.ne.s32.totalorder %s68, %s70
    %p74 = scmp.eq.s32.totalorder %s13, 0
    %p75 = por %p73, %p74
    %p76 = scmp.ne.s32.totalorder %s68, %s70
    %p77 = scmp.eq.s32.totalorder %s18, 1
    %p78 = por %p76, %p77
    %p79 = scmp.ne.s32.totalorder %s70, %s71
    %p80 = scmp.eq.s32.totalorder %s18, 0
    %p81 = por %p79, %p80
    %p82 = scmp.ne.s32.totalorder %s70, %s71
    %p83 = scmp.eq.s32.totalorder %s19, 1
    %p84 = por %p82, %p83
    %p86 = scmp.ne.s32.totalorder %s71, %s85
    %p87 = scmp.eq.s32.totalorder %s19, 0
    %p88 = por %p86, %p87
    %s90 = sadd.s32 %s89, 1
    %p93 = scmp.eq.s32.totalorder %s13, 1
    %p94 = scmp.ne.s32.totalorder %s89, %s91
    %p95 = scmp.eq.s32.totalorder %s13, 0
    %p96 = por %p94, %p95
    %p97 = scmp.ne.s32.totalorder %s89, %s91
    %p98 = scmp.eq.s32.totalorder %s18, 1
    %p99 = por %p97, %p98
    %p100 = scmp.ne.s32.totalorder %s91, %s92
    %p101 = scmp.eq.s32.totalorder %s18, 0
    %p102 = por %p100, %p101
    %p103 = scmp.ne.s32.totalorder %s91, %s92
    %p104 = scmp.eq.s32.totalorder %s19, 1
    %p105 = por %p103, %p104
    %p107 = scmp.ne.s32.totalorder %s92, %s106
    %p108 = scmp.eq.s32.totalorder %s19, 0
    %p109 = por %p107, %p108
    %s111 = sadd.s32 %s110, 1
    %p114 = scmp.eq.s32.totalorder %s13, 1
    %p115 = scmp.ne.s32.totalorder %s110, %s112
    %p116 = scmp.eq.s32.totalorder %s13, 0
    %p117 = por %p115, %p116
    %p118 = scmp.ne.s32.totalorder %s110, %s112
    %p119 = scmp.eq.s32.totalorder %s18, 1
    %p120 = por %p118, %p119
    %p121 = scmp.ne.s32.totalorder %s112, %s113
    %p122 = scmp.eq.s32.totalorder %s18, 0
    %p123 = por %p121, %p122
    %p124 = scmp.ne.s32.totalorder %s112, %s113
    %p125 = scmp.eq.s32.totalorder %s19, 1
    %p126 = por %p124, %p125
    %p128 = scmp.ne.s32.totalorder %s113, %s127
    %p129 = scmp.eq.s32.totalorder %s19, 0
    %p130 = por %p128, %p129
    %s132 = sadd.s32 %s131, 1
    %p135 = scmp.eq.s32.totalorder %s13, 1
    %p136 = scmp.ne.s32.totalorder %s131, %s133
    %p137 = scmp.eq.s32.totalorder %s13, 0
    %p138 = por %p136, %p137
    %p139 = scmp.ne.s32.totalorder %s131, %s133
    %p140 = scmp.eq.s32.totalorder %s18, 1
    %p141 = por %p139, %p140
    %p142 = scmp.ne.s32.totalorder %s133, %s134
    %p143 = scmp.eq.s32.totalorder %s18, 0
    %p144 = por %p142, %p143
    %p145 = scmp.ne.s32.totalorder %s133, %s134
    %p146 = scmp.eq.s32.totalorder %s19, 1
    %p147 = por %p145, %p146
    %p149 = scmp.ne.s32.totalorder %s134, %s148
    %p150 = scmp.eq.s32.totalorder %s19, 0
    %p151 = por %p149, %p150
    %s153 = sadd.s32 %s152, 1
    %p156 = scmp.eq.s32.totalorder %s13, 1
    %p157 = scmp.ne.s32.totalorder %s152, %s154
    %p158 = scmp.eq.s32.totalorder %s13, 0
    %p159 = por %p157, %p158
    %p160 = scmp.ne.s32.totalorder %s152, %s154
    %p161 = scmp.eq.s32.totalorder %s18, 1
    %p162 = por %p160, %p161
    %p163 = scmp.ne.s32.totalorder %s154, %s155
    %p164 = scmp.eq.s32.totalorder %s18, 0
    %p165 = por %p163, %p164
    %p166 = scmp.ne.s32.totalorder %s154, %s155
    %p167 = scmp.eq.s32.totalorder %s19, 1
    %p168 = por %p166, %p167
    %p170 = scmp.ne.s32.totalorder %s155, %s169
    %p171 = scmp.eq.s32.totalorder %s19, 0
    %p172 = por %p170, %p171
    %s173 = ssub.s32 %s13, %s20
    %p174 = scmp.eq.s32.totalorder %s173, 0
    %s176 = sadd.s32 %s175, 1
    %s177 = scalar_select %p174, %s175, %s176
    %p180 = pneg %p174
    %p181 = scmp.eq.s32.totalorder %s13, 1
    %p182 = por %p180, %p181
    %p183 = scmp.ne.s32.totalorder %s175, %s178
    %p184 = scmp.eq.s32.totalorder %s13, 0
    %p185 = por %p183, %p184
    %p186 = scmp.ne.s32.totalorder %s175, %s178
    %p187 = scmp.eq.s32.totalorder %s18, 1
    %p188 = por %p186, %p187
    %p189 = scmp.ne.s32.totalorder %s178, %s179
    %p190 = scmp.eq.s32.totalorder %s18, 0
    %p191 = por %p189, %p190
    %p192 = scmp.ne.s32.totalorder %s178, %s179
    %p193 = scmp.eq.s32.totalorder %s19, 1
    %p194 = por %p192, %p193
    %p196 = scmp.ne.s32.totalorder %s179, %s195
    %p197 = scmp.eq.s32.totalorder %s19, 0
    %p198 = por %p196, %p197
    %p199 = scmp.le.s32.totalorder 1, %s13
    %p200 = scmp.lt.s32.totalorder %s13, 3
    %p201 = pnand %p199, %p200
    %p202 = pneg %p201
    // Predicated region
    $region9: #{shallow_convnet_forward.1} parent=5 // pred_check
      _
    $region10: #{shallow_convnet_forward.1} parent=5 // pred_check_branch
      %204 = sbr.rel (%p201) target = $region12
    $region11: #{shallow_convnet_forward.1} parent=5 // pred_region
      %s205 = ssub.s32 %s13, 1
      // Predicated region
      $region13: #{shallow_convnet_forward.1} parent=11 // pred_check
        %p206 = pneg %p60
      $region14: #{shallow_convnet_forward.1} parent=11 // pred_check_branch
        %208 = sbr.rel (%p206) target = $region16
      $region15: #{shallow_convnet_forward.1} parent=11 // pred_region
        _
      $region16: #{shallow_convnet_forward.1} parent=11 // pred_fallthru
        _
      // Predicated region
      $region17: #{shallow_convnet_forward.1} parent=11 // pred_check
        %p209 = pneg %p81
      $region18: #{shallow_convnet_forward.1} parent=11 // pred_check_branch
        %211 = sbr.rel (%p209) target = $region20
      $region19: #{shallow_convnet_forward.1} parent=11 // pred_region
        _
      $region20: #{shallow_convnet_forward.1} parent=11 // pred_fallthru
        _
      // Predicated region
      $region21: #{shallow_convnet_forward.1} parent=11 // pred_check
        %p212 = pneg %p102
      $region22: #{shallow_convnet_forward.1} parent=11 // pred_check_branch
        %214 = sbr.rel (%p212) target = $region24
      $region23: #{shallow_convnet_forward.1} parent=11 // pred_region
        _
      $region24: #{shallow_convnet_forward.1} parent=11 // pred_fallthru
        _
      // Predicated region
      $region25: #{shallow_convnet_forward.1} parent=11 // pred_check
        %p215 = pneg %p123
      $region26: #{shallow_convnet_forward.1} parent=11 // pred_check_branch
        %217 = sbr.rel (%p215) target = $region28
      $region27: #{shallow_convnet_forward.1} parent=11 // pred_region
        _
      $region28: #{shallow_convnet_forward.1} parent=11 // pred_fallthru
        _
      // Predicated region
      $region29: #{shallow_convnet_forward.1} parent=11 // pred_check
        %p218 = pneg %p144
      $region30: #{shallow_convnet_forward.1} parent=11 // pred_check_branch
        %220 = sbr.rel (%p218) target = $region32
      $region31: #{shallow_convnet_forward.1} parent=11 // pred_region
        _
      $region32: #{shallow_convnet_forward.1} parent=11 // pred_fallthru
        _
      // Predicated region
      $region33: #{shallow_convnet_forward.1} parent=11 // pred_check
        %p221 = pneg %p165
      $region34: #{shallow_convnet_forward.1} parent=11 // pred_check_branch
        %223 = sbr.rel (%p221) target = $region36
      $region35: #{shallow_convnet_forward.1} parent=11 // pred_region
        _
      $region36: #{shallow_convnet_forward.1} parent=11 // pred_fallthru
        _
    $region12: #{shallow_convnet_forward.1} parent=5 // pred_fallthru
      _
    %p224 = scmp.lt.s32.totalorder %s13, 2
    // Predicated region
    $region37: #{shallow_convnet_forward.1} parent=5 // pred_check
      %p225 = pneg %p224
    $region38: #{shallow_convnet_forward.1} parent=5 // pred_check_branch
      %227 = sbr.rel (%p225) target = $region40
    $region39: #{shallow_convnet_forward.1} parent=5 // pred_region
      // Predicated region
      $region41: #{shallow_convnet_forward.1} parent=39 // pred_check
        %p228 = pneg %p33
      $region42: #{shallow_convnet_forward.1} parent=39 // pred_check_branch
        %230 = sbr.rel (%p228) target = $region44
      $region43: #{shallow_convnet_forward.1} parent=39 // pred_region
        %s231 = smul.u32 13, %s13
        %p232 = scmp.lt.s32.totalorder %s231, 25
        %s233 = scalar_select %p232, %s231, 25
        %s234 = smul.addr %s233, 6
        %s235 = smul.addr %s234, 8
        %s236 = scalar_lea.vmem %s0, %s235
        %s237 = smul.u32 13, %s13
      $region44: #{shallow_convnet_forward.1} parent=39 // pred_fallthru
        _
    $region40: #{shallow_convnet_forward.1} parent=5 // pred_fallthru
      _
    %p238 = scmp.le.s32.totalorder 1, %s13
    %p239 = scmp.lt.s32.totalorder %s13, 3
    %p240 = pnand %p238, %p239
    %p241 = pneg %p240
    // Predicated region
    $region45: #{shallow_convnet_forward.1} parent=5 // pred_check
      _
    $region46: #{shallow_convnet_forward.1} parent=5 // pred_check_branch
      %243 = sbr.rel (%p240) target = $region48
    $region47: #{shallow_convnet_forward.1} parent=5 // pred_region
      %s244 = ssub.s32 %s13, 1
      %s245 = smul.u32 13, %s18
      %p246 = scmp.lt.s32.totalorder %s245, 25
      %s247 = scalar_select %p246, %s245, 25
      %s248 = smul.addr %s247, 6
      %s249 = smul.addr %s248, 8
      %s250 = scalar_lea.vmem %s0, %s249
      %p251 = pneg %p39
      %p252 = pneg %p36
      %p253 = pneg %p60
      %p254 = pneg %p57
      %p255 = pneg %p81
      %p256 = pneg %p78
      %p257 = pneg %p102
      %p258 = pneg %p99
      %p259 = pneg %p123
      %p260 = pneg %p120
      %p261 = pneg %p144
      %p262 = pneg %p141
      %p263 = pneg %p165
      %p264 = pneg %p162
      %p265 = pneg %p191
      %p266 = pneg %p188
      %p267 = scmp.lt.s32.totalorder %s18, 1
      %s268 = scalar_select %p267, %s18, 1
      %s269 = smul.addr %s268, 4
      %s270 = scalar_lea.vmem %s7, %s269
      %s271 = smul.u32 13, %s18
      %p272 = scmp.lt.s32.totalorder %s271, 25
      %s273 = scalar_select %p272, %s271, 25
      %s274 = smul.addr %s273, 6
      %s275 = smul.addr %s274, 8
      %s276 = scalar_lea.vmem %s0, %s275
      %s277 = smul.u32 13, %s18
      %p278 = scmp.lt.s32.totalorder %s18, 1
      %s279 = scalar_select %p278, %s18, 1
      %s280 = smul.addr %s279, 4
      %s281 = scalar_lea.vmem %s7, %s280
      %v282 = vld [vmem:[%s1] sm:$0xff]
      %v283 = vld [vmem:[%s1 + $0x8] sm:$0xff]
      %v284 = vld [vmem:[%s1 + $0x10] sm:$0xff]
      %v285 = vld [vmem:[%s1 + $0x18] sm:$0xff]
      %v286 = vld [vmem:[%s1 + $0x20] sm:$0xff]
      %v287 = vld [vmem:[%s1 + $0x28] sm:$0xff]
      %v288 = vld [vmem:[%s1 + $0x30] sm:$0xff]
      %v289 = vld [vmem:[%s1 + $0x38] sm:$0xff]
      %v290 = vld [vmem:[%s1 + $0x40] sm:$0xff]
      %v291 = vld [vmem:[%s1 + $0x48] sm:$0xff]
      %v292 = vld [vmem:[%s1 + $0x50] sm:$0xff]
      %v293 = vld [vmem:[%s1 + $0x58] sm:$0xff]
      %v294 = vld [vmem:[%s1 + $0x60] sm:$0xff]
      %v295 = vld [vmem:[%s1 + $0x68] sm:$0xff]
      %v296 = vld [vmem:[%s1 + $0x70] sm:$0xff]
      %v297 = vld [vmem:[%s1 + $0x78] sm:$0xff]
      %v298 = vld [vmem:[%s276] sm:$0xff]
      %v299 = vld [vmem:[%s276 + $0x8] sm:$0xff]
      %v300 = vld [vmem:[%s276 + $0x10] sm:$0xff]
      %v301 = vld [vmem:[%s276 + $0x18] sm:$0xff]
      %v302 = vld [vmem:[%s276 + $0x20] sm:$0xff]
      %v303 = vld [vmem:[%s276 + $0x28] sm:$0xff]
      %v304 = vld [vmem:[%s276 + $0x30] sm:$0xff]
      %v305 = vld [vmem:[%s276 + $0x38] sm:$0xff]
      %v306 = vld [vmem:[%s276 + $0x40] sm:$0xff]
      %v307 = vld [vmem:[%s276 + $0x48] sm:$0xff]
      %v308 = vld [vmem:[%s276 + $0x50] sm:$0xff]
      %v309 = vld [vmem:[%s276 + $0x58] sm:$0xff]
      %v310 = vld [vmem:[%s276 + $0x60] sm:$0xff]
      %v311 = vld [vmem:[%s276 + $0x68] sm:$0xff]
      %v312 = vld [vmem:[%s276 + $0x70] sm:$0xff]
      %v313 = vld [vmem:[%s276 + $0x78] sm:$0xff]
      %v314 = vld [vmem:[%s276 + $0x80] sm:$0xff]
      %v315 = vld [vmem:[%s276 + $0x88] sm:$0xff]
      %v316 = vld [vmem:[%s276 + $0x90] sm:$0xff]
      %v317 = vld [vmem:[%s276 + $0x98] sm:$0xff]
      %v318 = vld [vmem:[%s276 + $0xa0] sm:$0xff]
      %v319 = vld [vmem:[%s276 + $0xa8] sm:$0xff]
      %v320 = vld [vmem:[%s276 + $0xb0] sm:$0xff]
      %v321 = vld [vmem:[%s276 + $0xb8] sm:$0xff]
      %v322 = vld [vmem:[%s276 + $0xc0] sm:$0xff]
      %v323 = vld [vmem:[%s276 + $0xc8] sm:$0xff]
      %v324 = vld [vmem:[%s276 + $0xd0] sm:$0xff]
      %v325 = vld [vmem:[%s276 + $0xd8] sm:$0xff]
      %v326 = vld [vmem:[%s276 + $0xe0] sm:$0xff]
      %v327 = vld [vmem:[%s276 + $0xe8] sm:$0xff]
      %v328 = vld [vmem:[%s276 + $0xf0] sm:$0xff]
      %v329 = vld [vmem:[%s276 + $0xf8] sm:$0xff]
      %v330 = vld [vmem:[%s276 + $0x100] sm:$0xff]
      %v331 = vld [vmem:[%s276 + $0x108] sm:$0xff]
      %v332 = vld [vmem:[%s276 + $0x110] sm:$0xff]
      %v333 = vld [vmem:[%s276 + $0x118] sm:$0xff]
      %v334 = vld [vmem:[%s276 + $0x120] sm:$0xff]
      %v335 = vld [vmem:[%s276 + $0x128] sm:$0xff]
      %v336 = vld [vmem:[%s276 + $0x130] sm:$0xff]
      %v337 = vld [vmem:[%s276 + $0x138] sm:$0xff]
      %v338 = vld [vmem:[%s276 + $0x140] sm:$0xff]
      %v339 = vld [vmem:[%s276 + $0x148] sm:$0xff]
      %v340 = vld [vmem:[%s276 + $0x150] sm:$0xff]
      %v341 = vld [vmem:[%s276 + $0x158] sm:$0xff]
      %v342 = vld [vmem:[%s276 + $0x160] sm:$0xff]
      %v343 = vld [vmem:[%s276 + $0x168] sm:$0xff]
      %v344 = vld [vmem:[%s276 + $0x170] sm:$0xff]
      %v345 = vld [vmem:[%s276 + $0x178] sm:$0xff]
      %v346 = vld [vmem:[%s276 + $0x180] sm:$0xff]
      %v347 = vld [vmem:[%s276 + $0x188] sm:$0xff]
      %v348 = vld [vmem:[%s276 + $0x190] sm:$0xff]
      %v349 = vld [vmem:[%s276 + $0x198] sm:$0xff]
      %v350 = vld [vmem:[%s276 + $0x1a0] sm:$0xff]
      %v351 = vld [vmem:[%s276 + $0x1a8] sm:$0xff]
      %v352 = vld [vmem:[%s276 + $0x1b0] sm:$0xff]
      %v353 = vld [vmem:[%s276 + $0x1b8] sm:$0xff]
      %v354 = vld [vmem:[%s276 + $0x1c0] sm:$0xff]
      %v355 = vld [vmem:[%s276 + $0x1c8] sm:$0xff]
      %v356 = vld [vmem:[%s276 + $0x1d0] sm:$0xff]
      %v357 = vld [vmem:[%s276 + $0x1d8] sm:$0xff]
      %v358 = vld [vmem:[%s276 + $0x1e0] sm:$0xff]
      %v359 = vld [vmem:[%s276 + $0x1e8] sm:$0xff]
      %v360 = vld [vmem:[%s276 + $0x1f0] sm:$0xff]
      %v361 = vld [vmem:[%s276 + $0x1f8] sm:$0xff]
      %v362 = vld [vmem:[%s276 + $0x200] sm:$0xff]
      %v363 = vld [vmem:[%s276 + $0x208] sm:$0xff]
      %v364 = vld [vmem:[%s276 + $0x210] sm:$0xff]
      %v365 = vld [vmem:[%s276 + $0x218] sm:$0xff]
      %v366 = vld [vmem:[%s276 + $0x220] sm:$0xff]
      %v367 = vld [vmem:[%s276 + $0x228] sm:$0xff]
      %v368 = vld [vmem:[%s276 + $0x230] sm:$0xff]
      %v369 = vld [vmem:[%s276 + $0x238] sm:$0xff]
      %v370 = vld [vmem:[%s276 + $0x240] sm:$0xff]
      %v371 = vld [vmem:[%s276 + $0x248] sm:$0xff]
      %v372 = vld [vmem:[%s276 + $0x250] sm:$0xff]
      %v373 = vld [vmem:[%s276 + $0x258] sm:$0xff]
      %v374 = vld [vmem:[%s276 + $0x260] sm:$0xff]
      %v375 = vld [vmem:[%s276 + $0x268] sm:$0xff]
      %v376 = vld [vmem:[%s2] sm:$0xff]
      %v377 = vld [vmem:[%s2 + $0x8] sm:$0xff]
      %v378 = vld [vmem:[%s2 + $0x10] sm:$0xff]
      %v379 = vld [vmem:[%s2 + $0x18] sm:$0xff]
      %v380 = vld [vmem:[%s2 + $0x20] sm:$0xff]
      %v381 = vld [vmem:[%s2 + $0x28] sm:$0xff]
      %v382 = vld [vmem:[%s2 + $0x30] sm:$0xff]
      %v383 = vld [vmem:[%s2 + $0x38] sm:$0xff]
      %v384 = vld [vmem:[%s2 + $0x40] sm:$0xff]
      %v385 = vld [vmem:[%s2 + $0x48] sm:$0xff]
      %v386 = vld [vmem:[%s2 + $0x50] sm:$0xff]
      %v387 = vld [vmem:[%s2 + $0x58] sm:$0xff]
      %v388 = vld [vmem:[%s2 + $0x60] sm:$0xff]
      %v389 = vld [vmem:[%s2 + $0x68] sm:$0xff]
      %v390 = vld [vmem:[%s2 + $0x70] sm:$0xff]
      %v391 = vld [vmem:[%s2 + $0x78] sm:$0xff]
      %393 = vset.pattern.permute.xlu0 0
      %394 = vperm.xlu0 %393, %v376
      %v395 = vpop.permute.xlu0 %394
      %398 = vset.pattern.permute.xlu0 0
      %399 = vperm.xlu0 %398, %v377
      %v400 = vpop.permute.xlu0 %399
      %403 = vset.pattern.permute.xlu0 0
      %404 = vperm.xlu0 %403, %v378
      %v405 = vpop.permute.xlu0 %404
      %408 = vset.pattern.permute.xlu0 0
      %409 = vperm.xlu0 %408, %v379
      %v410 = vpop.permute.xlu0 %409
      %413 = vset.pattern.permute.xlu0 0
      %414 = vperm.xlu0 %413, %v380
      %v415 = vpop.permute.xlu0 %414
      %418 = vset.pattern.permute.xlu0 0
      %419 = vperm.xlu0 %418, %v381
      %v420 = vpop.permute.xlu0 %419
      %423 = vset.pattern.permute.xlu0 0
      %424 = vperm.xlu0 %423, %v382
      %v425 = vpop.permute.xlu0 %424
      %428 = vset.pattern.permute.xlu0 0
      %429 = vperm.xlu0 %428, %v383
      %v430 = vpop.permute.xlu0 %429
      %433 = vset.pattern.permute.xlu0 0
      %434 = vperm.xlu0 %433, %v384
      %v435 = vpop.permute.xlu0 %434
      %438 = vset.pattern.permute.xlu0 0
      %439 = vperm.xlu0 %438, %v385
      %v440 = vpop.permute.xlu0 %439
      %443 = vset.pattern.permute.xlu0 0
      %444 = vperm.xlu0 %443, %v386
      %v445 = vpop.permute.xlu0 %444
      %448 = vset.pattern.permute.xlu0 0
      %449 = vperm.xlu0 %448, %v387
      %v450 = vpop.permute.xlu0 %449
      %453 = vset.pattern.permute.xlu0 0
      %454 = vperm.xlu0 %453, %v388
      %v455 = vpop.permute.xlu0 %454
      %458 = vset.pattern.permute.xlu0 0
      %459 = vperm.xlu0 %458, %v389
      %v460 = vpop.permute.xlu0 %459
      %463 = vset.pattern.permute.xlu0 0
      %464 = vperm.xlu0 %463, %v390
      %v465 = vpop.permute.xlu0 %464
      %468 = vset.pattern.permute.xlu0 0
      %469 = vperm.xlu0 %468, %v391
      %v470 = vpop.permute.xlu0 %469
      %vm472 = vcmask 850944
      %v474 = vsel %vm472, %v282, 0
      %v477 = vsel %vm472, %v283, 0
      %v480 = vsel %vm472, %v284, 0
      %v483 = vsel %vm472, %v285, 0
      %v486 = vsel %vm472, %v286, 0
      %v489 = vsel %vm472, %v287, 0
      %v492 = vsel %vm472, %v288, 0
      %v495 = vsel %vm472, %v289, 0
      %v498 = vsel %vm472, %v290, 0
      %v501 = vsel %vm472, %v291, 0
      %v504 = vsel %vm472, %v292, 0
      %v507 = vsel %vm472, %v293, 0
      %v510 = vsel %vm472, %v294, 0
      %v513 = vsel %vm472, %v295, 0
      %v516 = vsel %vm472, %v296, 0
      %v519 = vsel %vm472, %v297, 0
      %521 = vmatprep.subr.mxu0 0.0
      %522 = vmatpush1.msra.mxu0 0.0
      %523 = vmatprep.subr.mxu0 0.0
      %524 = vmatpush1.msra.mxu0 0.0
      %525 = vmatprep.subr.mxu0 0.0
      %526 = vmatpush1.msra.mxu0 0.0
      %527 = vmatprep.subr.mxu0 %v371
      %528 = vmatpush1.msra.mxu0 %v370
      %529 = vmatprep.subr.mxu0 %v365
      %530 = vmatpush1.msra.mxu0 %v364
      %531 = vmatprep.subr.mxu0 %v359
      %532 = vmatpush1.msra.mxu0 %v358
      %533 = vmatprep.subr.mxu0 %v353
      %534 = vmatpush1.msra.mxu0 %v352
      %535 = vmatprep.subr.mxu0 %v347
      %536 = vmatpush1.msra.mxu0 %v346
      %537 = vmatprep.subr.mxu0 %v341
      %538 = vmatpush1.msra.mxu0 %v340
      %539 = vmatprep.subr.mxu0 %v335
      %540 = vmatpush1.msra.mxu0 %v334
      %541 = vmatprep.subr.mxu0 %v329
      %542 = vmatpush1.msra.mxu0 %v328
      %543 = vmatprep.subr.mxu0 %v323
      %544 = vmatpush1.msra.mxu0 %v322
      %545 = vmatprep.subr.mxu0 %v317
      %546 = vmatpush1.msra.mxu0 %v316
      %547 = vmatprep.subr.mxu0 %v311
      %548 = vmatpush1.msra.mxu0 %v310
      %549 = vmatprep.subr.mxu0 %v305
      %550 = vmatpush1.msra.mxu0 %v304
      %551 = vmatprep.subr.mxu0 %v299
      %552 = vmatpush1.msra.mxu0 %v298
      %553 = vmatprep.subr.mxu0 0.0
      %554 = vmatpush2.msra.mxu0 0.0
      %555 = vmatprep.subr.mxu0 0.0
      %556 = vmatpush2.msra.mxu0 0.0
      %557 = vmatprep.subr.mxu0 0.0
      %558 = vmatpush2.msra.mxu0 0.0
      %559 = vmatprep.subr.mxu0 0.0
      %560 = vmatpush2.msra.mxu0 0.0
      %561 = vmatprep.subr.mxu0 0.0
      %562 = vmatpush2.msra.mxu0 0.0
      %563 = vmatprep.subr.mxu0 0.0
      %564 = vmatpush2.msra.mxu0 0.0
      %565 = vmatprep.subr.mxu0 0.0
      %566 = vmatpush2.msra.mxu0 0.0
      %567 = vmatprep.subr.mxu0 0.0
      %568 = vmatpush2.msra.mxu0 0.0
      %569 = vmatprep.subr.mxu0 0.0
      %570 = vmatpush2.msra.mxu0 0.0
      %571 = vmatprep.subr.mxu0 0.0
      %572 = vmatpush2.msra.mxu0 0.0
      %573 = vmatprep.subr.mxu0 0.0
      %574 = vmatpush2.msra.mxu0 0.0
      %575 = vmatprep.subr.mxu0 0.0
      %576 = vmatpush2.msra.mxu0 0.0
      %577 = vmatprep.subr.mxu0 0.0
      %578 = vmatpush2.msra.mxu0 0.0
      %579 = vmatprep.subr.mxu0 0.0
      %580 = vmatpush2.msra.mxu0 0.0
      %581 = vmatprep.subr.mxu0 0.0
      %582 = vmatpush2.msra.mxu0 0.0
      %583 = vmatprep.subr.mxu0 0.0
      %584 = vmatpush2.msra.mxu0 0.0
      %585 = vmatprep.mubr.f32.mxu0 0.0
      %586 = vmatmul.mubr.f32.gmra.mxu0 %v474
      %v587 = vpop.f32.mrf.mxu0
      %v588 = vadd.f32 %v395, %v587
      %v589 = vpop.f32.mrf.mxu0
      %v590 = vadd.f32 %v395, %v589
      %591 = vmatprep.mubr.f32.mxu0 0.0
      %592 = vmatmul.mubr.f32.gmra.mxu0 %v477
      %v593 = vpop.f32.mrf.mxu0
      %v594 = vadd.f32 %v400, %v593
      %v595 = vpop.f32.mrf.mxu0
      %v596 = vadd.f32 %v400, %v595
      %597 = vmatprep.mubr.f32.mxu0 0.0
      %598 = vmatmul.mubr.f32.gmra.mxu0 %v480
      %v599 = vpop.f32.mrf.mxu0
      %v600 = vadd.f32 %v405, %v599
      %v601 = vpop.f32.mrf.mxu0
      %v602 = vadd.f32 %v405, %v601
      %603 = vmatprep.mubr.f32.mxu0 0.0
      %604 = vmatmul.mubr.f32.gmra.mxu0 %v483
      %v605 = vpop.f32.mrf.mxu0
      %v606 = vadd.f32 %v410, %v605
      %v607 = vpop.f32.mrf.mxu0
      %v608 = vadd.f32 %v410, %v607
      %609 = vmatprep.mubr.f32.mxu0 0.0
      %610 = vmatmul.mubr.f32.gmra.mxu0 %v486
      %v611 = vpop.f32.mrf.mxu0
      %v612 = vadd.f32 %v415, %v611
      %v613 = vpop.f32.mrf.mxu0
      %v614 = vadd.f32 %v415, %v613
      %615 = vmatprep.mubr.f32.mxu0 0.0
      %616 = vmatmul.mubr.f32.gmra.mxu0 %v489
      %v617 = vpop.f32.mrf.mxu0
      %v618 = vadd.f32 %v420, %v617
      %v619 = vpop.f32.mrf.mxu0
      %v620 = vadd.f32 %v420, %v619
      %621 = vmatprep.mubr.f32.mxu0 0.0
      %622 = vmatmul.mubr.f32.gmra.mxu0 %v492
      %v623 = vpop.f32.mrf.mxu0
      %v624 = vadd.f32 %v425, %v623
      %v625 = vpop.f32.mrf.mxu0
      %v626 = vadd.f32 %v425, %v625
      %627 = vmatprep.mubr.f32.mxu0 0.0
      %628 = vmatmul.mubr.f32.gmra.mxu0 %v495
      %v629 = vpop.f32.mrf.mxu0
      %v630 = vadd.f32 %v430, %v629
      %v631 = vpop.f32.mrf.mxu0
      %v632 = vadd.f32 %v430, %v631
      %633 = vmatprep.mubr.f32.mxu0 0.0
      %634 = vmatmul.mubr.f32.gmra.mxu0 %v498
      %v635 = vpop.f32.mrf.mxu0
      %v636 = vadd.f32 %v435, %v635
      %v637 = vpop.f32.mrf.mxu0
      %v638 = vadd.f32 %v435, %v637
      %639 = vmatprep.mubr.f32.mxu0 0.0
      %640 = vmatmul.mubr.f32.gmra.mxu0 %v501
      %v641 = vpop.f32.mrf.mxu0
      %v642 = vadd.f32 %v440, %v641
      %v643 = vpop.f32.mrf.mxu0
      %v644 = vadd.f32 %v440, %v643
      %645 = vmatprep.mubr.f32.mxu0 0.0
      %646 = vmatmul.mubr.f32.gmra.mxu0 %v504
      %v647 = vpop.f32.mrf.mxu0
      %v648 = vadd.f32 %v445, %v647
      %v649 = vpop.f32.mrf.mxu0
      %v650 = vadd.f32 %v445, %v649
      %651 = vmatprep.mubr.f32.mxu0 0.0
      %652 = vmatmul.mubr.f32.gmra.mxu0 %v507
      %v653 = vpop.f32.mrf.mxu0
      %v654 = vadd.f32 %v450, %v653
      %v655 = vpop.f32.mrf.mxu0
      %v656 = vadd.f32 %v450, %v655
      %657 = vmatprep.mubr.f32.mxu0 0.0
      %658 = vmatmul.mubr.f32.gmra.mxu0 %v510
      %v659 = vpop.f32.mrf.mxu0
      %v660 = vadd.f32 %v455, %v659
      %v661 = vpop.f32.mrf.mxu0
      %v662 = vadd.f32 %v455, %v661
      %663 = vmatprep.mubr.f32.mxu0 0.0
      %664 = vmatmul.mubr.f32.gmra.mxu0 %v513
      %v665 = vpop.f32.mrf.mxu0
      %v666 = vadd.f32 %v460, %v665
      %v667 = vpop.f32.mrf.mxu0
      %v668 = vadd.f32 %v460, %v667
      %669 = vmatprep.mubr.f32.mxu0 0.0
      %670 = vmatmul.mubr.f32.gmra.mxu0 %v516
      %v671 = vpop.f32.mrf.mxu0
      %v672 = vadd.f32 %v465, %v671
      %v673 = vpop.f32.mrf.mxu0
      %v674 = vadd.f32 %v465, %v673
      %675 = vmatprep.mubr.f32.mxu0 0.0
      %676 = vmatmul.mubr.f32.gmra.mxu0 %v519
      %v677 = vpop.f32.mrf.mxu0
      %v678 = vadd.f32 %v470, %v677
      %v679 = vpop.f32.mrf.mxu0
      %v680 = vadd.f32 %v470, %v679
      %681 = vdwg.mxu0
      %682 = vmatprep.subr.mxu0 0.0
      %683 = vmatpush1.msra.mxu0 0.0
      %684 = vmatprep.subr.mxu0 0.0
      %685 = vmatpush1.msra.mxu0 0.0
      %686 = vmatprep.subr.mxu0 0.0
      %687 = vmatpush1.msra.mxu0 0.0
      %688 = vmatprep.subr.mxu0 %v373
      %689 = vmatpush1.msra.mxu0 %v372
      %690 = vmatprep.subr.mxu0 %v367
      %691 = vmatpush1.msra.mxu0 %v366
      %692 = vmatprep.subr.mxu0 %v361
      %693 = vmatpush1.msra.mxu0 %v360
      %694 = vmatprep.subr.mxu0 %v355
      %695 = vmatpush1.msra.mxu0 %v354
      %696 = vmatprep.subr.mxu0 %v349
      %697 = vmatpush1.msra.mxu0 %v348
      %698 = vmatprep.subr.mxu0 %v343
      %699 = vmatpush1.msra.mxu0 %v342
      %700 = vmatprep.subr.mxu0 %v337
      %701 = vmatpush1.msra.mxu0 %v336
      %702 = vmatprep.subr.mxu0 %v331
      %703 = vmatpush1.msra.mxu0 %v330
      %704 = vmatprep.subr.mxu0 %v325
      %705 = vmatpush1.msra.mxu0 %v324
      %706 = vmatprep.subr.mxu0 %v319
      %707 = vmatpush1.msra.mxu0 %v318
      %708 = vmatprep.subr.mxu0 %v313
      %709 = vmatpush1.msra.mxu0 %v312
      %710 = vmatprep.subr.mxu0 %v307
      %711 = vmatpush1.msra.mxu0 %v306
      %712 = vmatprep.subr.mxu0 %v301
      %713 = vmatpush1.msra.mxu0 %v300
      %714 = vmatprep.subr.mxu0 0.0
      %715 = vmatpush2.msra.mxu0 0.0
      %716 = vmatprep.subr.mxu0 0.0
      %717 = vmatpush2.msra.mxu0 0.0
      %718 = vmatprep.subr.mxu0 0.0
      %719 = vmatpush2.msra.mxu0 0.0
      %720 = vmatprep.subr.mxu0 0.0
      %721 = vmatpush2.msra.mxu0 0.0
      %722 = vmatprep.subr.mxu0 0.0
      %723 = vmatpush2.msra.mxu0 0.0
      %724 = vmatprep.subr.mxu0 0.0
      %725 = vmatpush2.msra.mxu0 0.0
      %726 = vmatprep.subr.mxu0 0.0
      %727 = vmatpush2.msra.mxu0 0.0
      %728 = vmatprep.subr.mxu0 0.0
      %729 = vmatpush2.msra.mxu0 0.0
      %730 = vmatprep.subr.mxu0 0.0
      %731 = vmatpush2.msra.mxu0 0.0
      %732 = vmatprep.subr.mxu0 0.0
      %733 = vmatpush2.msra.mxu0 0.0
      %734 = vmatprep.subr.mxu0 0.0
      %735 = vmatpush2.msra.mxu0 0.0
      %736 = vmatprep.subr.mxu0 0.0
      %737 = vmatpush2.msra.mxu0 0.0
      %738 = vmatprep.subr.mxu0 0.0
      %739 = vmatpush2.msra.mxu0 0.0
      %740 = vmatprep.subr.mxu0 0.0
      %741 = vmatpush2.msra.mxu0 0.0
      %742 = vmatprep.subr.mxu0 0.0
      %743 = vmatpush2.msra.mxu0 0.0
      %744 = vmatprep.subr.mxu0 0.0
      %745 = vmatpush2.msra.mxu0 0.0
      %746 = vmatprep.mubr.f32.mxu0 0.0
      %747 = vmatmul.mubr.f32.gmra.mxu0 %v474
      %v748 = vpop.f32.mrf.mxu0
      %v749 = vadd.f32 %v395, %v748
      %v750 = vpop.f32.mrf.mxu0
      %v751 = vadd.f32 %v395, %v750
      %752 = vmatprep.mubr.f32.mxu0 0.0
      %753 = vmatmul.mubr.f32.gmra.mxu0 %v477
      %v754 = vpop.f32.mrf.mxu0
      %v755 = vadd.f32 %v400, %v754
      %v756 = vpop.f32.mrf.mxu0
      %v757 = vadd.f32 %v400, %v756
      %758 = vmatprep.mubr.f32.mxu0 0.0
      %759 = vmatmul.mubr.f32.gmra.mxu0 %v480
      %v760 = vpop.f32.mrf.mxu0
      %v761 = vadd.f32 %v405, %v760
      %v762 = vpop.f32.mrf.mxu0
      %v763 = vadd.f32 %v405, %v762
      %764 = vmatprep.mubr.f32.mxu0 0.0
      %765 = vmatmul.mubr.f32.gmra.mxu0 %v483
      %v766 = vpop.f32.mrf.mxu0
      %v767 = vadd.f32 %v410, %v766
      %v768 = vpop.f32.mrf.mxu0
      %v769 = vadd.f32 %v410, %v768
      %770 = vmatprep.mubr.f32.mxu0 0.0
      %771 = vmatmul.mubr.f32.gmra.mxu0 %v486
      %v772 = vpop.f32.mrf.mxu0
      %v773 = vadd.f32 %v415, %v772
      %v774 = vpop.f32.mrf.mxu0
      %v775 = vadd.f32 %v415, %v774
      %776 = vmatprep.mubr.f32.mxu0 0.0
      %777 = vmatmul.mubr.f32.gmra.mxu0 %v489
      %v778 = vpop.f32.mrf.mxu0
      %v779 = vadd.f32 %v420, %v778
      %v780 = vpop.f32.mrf.mxu0
      %v781 = vadd.f32 %v420, %v780
      %782 = vmatprep.mubr.f32.mxu0 0.0
      %783 = vmatmul.mubr.f32.gmra.mxu0 %v492
      %v784 = vpop.f32.mrf.mxu0
      %v785 = vadd.f32 %v425, %v784
      %v786 = vpop.f32.mrf.mxu0
      %v787 = vadd.f32 %v425, %v786
      %788 = vmatprep.mubr.f32.mxu0 0.0
      %789 = vmatmul.mubr.f32.gmra.mxu0 %v495
      %v790 = vpop.f32.mrf.mxu0
      %v791 = vadd.f32 %v430, %v790
      %v792 = vpop.f32.mrf.mxu0
      %v793 = vadd.f32 %v430, %v792
      %794 = vmatprep.mubr.f32.mxu0 0.0
      %795 = vmatmul.mubr.f32.gmra.mxu0 %v498
      %v796 = vpop.f32.mrf.mxu0
      %v797 = vadd.f32 %v435, %v796
      %v798 = vpop.f32.mrf.mxu0
      %v799 = vadd.f32 %v435, %v798
      %800 = vmatprep.mubr.f32.mxu0 0.0
      %801 = vmatmul.mubr.f32.gmra.mxu0 %v501
      %v802 = vpop.f32.mrf.mxu0
      %v803 = vadd.f32 %v440, %v802
      %v804 = vpop.f32.mrf.mxu0
      %v805 = vadd.f32 %v440, %v804
      %806 = vmatprep.mubr.f32.mxu0 0.0
      %807 = vmatmul.mubr.f32.gmra.mxu0 %v504
      %v808 = vpop.f32.mrf.mxu0
      %v809 = vadd.f32 %v445, %v808
      %v810 = vpop.f32.mrf.mxu0
      %v811 = vadd.f32 %v445, %v810
      %812 = vmatprep.mubr.f32.mxu0 0.0
      %813 = vmatmul.mubr.f32.gmra.mxu0 %v507
      %v814 = vpop.f32.mrf.mxu0
      %v815 = vadd.f32 %v450, %v814
      %v816 = vpop.f32.mrf.mxu0
      %v817 = vadd.f32 %v450, %v816
      %818 = vmatprep.mubr.f32.mxu0 0.0
      %819 = vmatmul.mubr.f32.gmra.mxu0 %v510
      %v820 = vpop.f32.mrf.mxu0
      %v821 = vadd.f32 %v455, %v820
      %v822 = vpop.f32.mrf.mxu0
      %v823 = vadd.f32 %v455, %v822
      %824 = vmatprep.mubr.f32.mxu0 0.0
      %825 = vmatmul.mubr.f32.gmra.mxu0 %v513
      %v826 = vpop.f32.mrf.mxu0
      %v827 = vadd.f32 %v460, %v826
      %v828 = vpop.f32.mrf.mxu0
      %v829 = vadd.f32 %v460, %v828
      %830 = vmatprep.mubr.f32.mxu0 0.0
      %831 = vmatmul.mubr.f32.gmra.mxu0 %v516
      %v832 = vpop.f32.mrf.mxu0
      %v833 = vadd.f32 %v465, %v832
      %v834 = vpop.f32.mrf.mxu0
      %v835 = vadd.f32 %v465, %v834
      %836 = vmatprep.mubr.f32.mxu0 0.0
      %837 = vmatmul.mubr.f32.gmra.mxu0 %v519
      %v838 = vpop.f32.mrf.mxu0
      %v839 = vadd.f32 %v470, %v838
      %v840 = vpop.f32.mrf.mxu0
      %v841 = vadd.f32 %v470, %v840
      %842 = vdwg.mxu0
      %843 = vmatprep.subr.mxu0 0.0
      %844 = vmatpush1.msra.mxu0 0.0
      %845 = vmatprep.subr.mxu0 0.0
      %846 = vmatpush1.msra.mxu0 0.0
      %847 = vmatprep.subr.mxu0 0.0
      %848 = vmatpush1.msra.mxu0 0.0
      %849 = vmatprep.subr.mxu0 %v375
      %850 = vmatpush1.msra.mxu0 %v374
      %851 = vmatprep.subr.mxu0 %v369
      %852 = vmatpush1.msra.mxu0 %v368
      %853 = vmatprep.subr.mxu0 %v363
      %854 = vmatpush1.msra.mxu0 %v362
      %855 = vmatprep.subr.mxu0 %v357
      %856 = vmatpush1.msra.mxu0 %v356
      %857 = vmatprep.subr.mxu0 %v351
      %858 = vmatpush1.msra.mxu0 %v350
      %859 = vmatprep.subr.mxu0 %v345
      %860 = vmatpush1.msra.mxu0 %v344
      %861 = vmatprep.subr.mxu0 %v339
      %862 = vmatpush1.msra.mxu0 %v338
      %863 = vmatprep.subr.mxu0 %v333
      %864 = vmatpush1.msra.mxu0 %v332
      %865 = vmatprep.subr.mxu0 %v327
      %866 = vmatpush1.msra.mxu0 %v326
      %867 = vmatprep.subr.mxu0 %v321
      %868 = vmatpush1.msra.mxu0 %v320
      %869 = vmatprep.subr.mxu0 %v315
      %870 = vmatpush1.msra.mxu0 %v314
      %871 = vmatprep.subr.mxu0 %v309
      %872 = vmatpush1.msra.mxu0 %v308
      %873 = vmatprep.subr.mxu0 %v303
      %874 = vmatpush1.msra.mxu0 %v302
      %875 = vmatprep.subr.mxu0 0.0
      %876 = vmatpush2.msra.mxu0 0.0
      %877 = vmatprep.subr.mxu0 0.0
      %878 = vmatpush2.msra.mxu0 0.0
      %879 = vmatprep.subr.mxu0 0.0
      %880 = vmatpush2.msra.mxu0 0.0
      %881 = vmatprep.subr.mxu0 0.0
      %882 = vmatpush2.msra.mxu0 0.0
      %883 = vmatprep.subr.mxu0 0.0
      %884 = vmatpush2.msra.mxu0 0.0
      %885 = vmatprep.subr.mxu0 0.0
      %886 = vmatpush2.msra.mxu0 0.0
      %887 = vmatprep.subr.mxu0 0.0
      %888 = vmatpush2.msra.mxu0 0.0
      %889 = vmatprep.subr.mxu0 0.0
      %890 = vmatpush2.msra.mxu0 0.0
      %891 = vmatprep.subr.mxu0 0.0
      %892 = vmatpush2.msra.mxu0 0.0
      %893 = vmatprep.subr.mxu0 0.0
      %894 = vmatpush2.msra.mxu0 0.0
      %895 = vmatprep.subr.mxu0 0.0
      %896 = vmatpush2.msra.mxu0 0.0
      %897 = vmatprep.subr.mxu0 0.0
      %898 = vmatpush2.msra.mxu0 0.0
      %899 = vmatprep.subr.mxu0 0.0
      %900 = vmatpush2.msra.mxu0 0.0
      %901 = vmatprep.subr.mxu0 0.0
      %902 = vmatpush2.msra.mxu0 0.0
      %903 = vmatprep.subr.mxu0 0.0
      %904 = vmatpush2.msra.mxu0 0.0
      %905 = vmatprep.subr.mxu0 0.0
      %906 = vmatpush2.msra.mxu0 0.0
      %907 = vmatprep.mubr.f32.mxu0 0.0
      %908 = vmatmul.mubr.f32.gmra.mxu0 %v474
      %v909 = vpop.f32.mrf.mxu0
      %v910 = vadd.f32 %v395, %v909
      %v911 = vpop.f32.mrf.mxu0
      %v912 = vadd.f32 %v395, %v911
      %913 = vmatprep.mubr.f32.mxu0 0.0
      %914 = vmatmul.mubr.f32.gmra.mxu0 %v477
      %v915 = vpop.f32.mrf.mxu0
      %v916 = vadd.f32 %v400, %v915
      %v917 = vpop.f32.mrf.mxu0
      %v918 = vadd.f32 %v400, %v917
      %919 = vmatprep.mubr.f32.mxu0 0.0
      %920 = vmatmul.mubr.f32.gmra.mxu0 %v480
      %v921 = vpop.f32.mrf.mxu0
      %v922 = vadd.f32 %v405, %v921
      %v923 = vpop.f32.mrf.mxu0
      %v924 = vadd.f32 %v405, %v923
      %925 = vmatprep.mubr.f32.mxu0 0.0
      %926 = vmatmul.mubr.f32.gmra.mxu0 %v483
      %v927 = vpop.f32.mrf.mxu0
      %v928 = vadd.f32 %v410, %v927
      %v929 = vpop.f32.mrf.mxu0
      %v930 = vadd.f32 %v410, %v929
      %931 = vmatprep.mubr.f32.mxu0 0.0
      %932 = vmatmul.mubr.f32.gmra.mxu0 %v486
      %v933 = vpop.f32.mrf.mxu0
      %v934 = vadd.f32 %v415, %v933
      %v935 = vpop.f32.mrf.mxu0
      %v936 = vadd.f32 %v415, %v935
      %937 = vmatprep.mubr.f32.mxu0 0.0
      %938 = vmatmul.mubr.f32.gmra.mxu0 %v489
      %v939 = vpop.f32.mrf.mxu0
      %v940 = vadd.f32 %v420, %v939
      %v941 = vpop.f32.mrf.mxu0
      %v942 = vadd.f32 %v420, %v941
      %943 = vmatprep.mubr.f32.mxu0 0.0
      %944 = vmatmul.mubr.f32.gmra.mxu0 %v492
      %v945 = vpop.f32.mrf.mxu0
      %v946 = vadd.f32 %v425, %v945
      %v947 = vpop.f32.mrf.mxu0
      %v948 = vadd.f32 %v425, %v947
      %949 = vmatprep.mubr.f32.mxu0 0.0
      %950 = vmatmul.mubr.f32.gmra.mxu0 %v495
      %v951 = vpop.f32.mrf.mxu0
      %v952 = vadd.f32 %v430, %v951
      %v953 = vpop.f32.mrf.mxu0
      %v954 = vadd.f32 %v430, %v953
      %955 = vmatprep.mubr.f32.mxu0 0.0
      %956 = vmatmul.mubr.f32.gmra.mxu0 %v498
      %v957 = vpop.f32.mrf.mxu0
      %v958 = vadd.f32 %v435, %v957
      %v959 = vpop.f32.mrf.mxu0
      %v960 = vadd.f32 %v435, %v959
      %961 = vmatprep.mubr.f32.mxu0 0.0
      %962 = vmatmul.mubr.f32.gmra.mxu0 %v501
      %v963 = vpop.f32.mrf.mxu0
      %v964 = vadd.f32 %v440, %v963
      %v965 = vpop.f32.mrf.mxu0
      %v966 = vadd.f32 %v440, %v965
      %967 = vmatprep.mubr.f32.mxu0 0.0
      %968 = vmatmul.mubr.f32.gmra.mxu0 %v504
      %v969 = vpop.f32.mrf.mxu0
      %v970 = vadd.f32 %v445, %v969
      %v971 = vpop.f32.mrf.mxu0
      %v972 = vadd.f32 %v445, %v971
      %973 = vmatprep.mubr.f32.mxu0 0.0
      %974 = vmatmul.mubr.f32.gmra.mxu0 %v507
      %v975 = vpop.f32.mrf.mxu0
      %v976 = vadd.f32 %v450, %v975
      %v977 = vpop.f32.mrf.mxu0
      %v978 = vadd.f32 %v450, %v977
      %979 = vmatprep.mubr.f32.mxu0 0.0
      %980 = vmatmul.mubr.f32.gmra.mxu0 %v510
      %v981 = vpop.f32.mrf.mxu0
      %v982 = vadd.f32 %v455, %v981
      %v983 = vpop.f32.mrf.mxu0
      %v984 = vadd.f32 %v455, %v983
      %985 = vmatprep.mubr.f32.mxu0 0.0
      %986 = vmatmul.mubr.f32.gmra.mxu0 %v513
      %v987 = vpop.f32.mrf.mxu0
      %v988 = vadd.f32 %v460, %v987
      %v989 = vpop.f32.mrf.mxu0
      %v990 = vadd.f32 %v460, %v989
      %991 = vmatprep.mubr.f32.mxu0 0.0
      %992 = vmatmul.mubr.f32.gmra.mxu0 %v516
      %v993 = vpop.f32.mrf.mxu0
      %v994 = vadd.f32 %v465, %v993
      %v995 = vpop.f32.mrf.mxu0
      %v996 = vadd.f32 %v465, %v995
      %997 = vmatprep.mubr.f32.mxu0 0.0
      %998 = vmatmul.mubr.f32.gmra.mxu0 %v519
      %v999 = vpop.f32.mrf.mxu0
      %v1000 = vadd.f32 %v470, %v999
      %v1001 = vpop.f32.mrf.mxu0
      %v1002 = vadd.f32 %v470, %v1001
      %1003 = vdwg.mxu0
      %v1004 = vmul.f32 %v588, %v588
      %v1005 = vmul.f32 %v590, %v590
      %v1006 = vmul.f32 %v749, %v749
      %v1007 = vmul.f32 %v751, %v751
      %v1008 = vmul.f32 %v910, %v910
      %v1009 = vmul.f32 %v912, %v912
      %v1010 = vmul.f32 %v594, %v594
      %v1011 = vmul.f32 %v596, %v596
      %v1012 = vmul.f32 %v755, %v755
      %v1013 = vmul.f32 %v757, %v757
      %v1014 = vmul.f32 %v916, %v916
      %v1015 = vmul.f32 %v918, %v918
      %v1016 = vmul.f32 %v600, %v600
      %v1017 = vmul.f32 %v602, %v602
      %v1018 = vmul.f32 %v761, %v761
      %v1019 = vmul.f32 %v763, %v763
      %v1020 = vmul.f32 %v922, %v922
      %v1021 = vmul.f32 %v924, %v924
      %v1022 = vmul.f32 %v606, %v606
      %v1023 = vmul.f32 %v608, %v608
      %v1024 = vmul.f32 %v767, %v767
      %v1025 = vmul.f32 %v769, %v769
      %v1026 = vmul.f32 %v928, %v928
      %v1027 = vmul.f32 %v930, %v930
      %v1028 = vmul.f32 %v612, %v612
      %v1029 = vmul.f32 %v614, %v614
      %v1030 = vmul.f32 %v773, %v773
      %v1031 = vmul.f32 %v775, %v775
      %v1032 = vmul.f32 %v934, %v934
      %v1033 = vmul.f32 %v936, %v936
      %v1034 = vmul.f32 %v618, %v618
      %v1035 = vmul.f32 %v620, %v620
      %v1036 = vmul.f32 %v779, %v779
      %v1037 = vmul.f32 %v781, %v781
      %v1038 = vmul.f32 %v940, %v940
      %v1039 = vmul.f32 %v942, %v942
      %v1040 = vmul.f32 %v624, %v624
      %v1041 = vmul.f32 %v626, %v626
      %v1042 = vmul.f32 %v785, %v785
      %v1043 = vmul.f32 %v787, %v787
      %v1044 = vmul.f32 %v946, %v946
      %v1045 = vmul.f32 %v948, %v948
      %v1046 = vmul.f32 %v630, %v630
      %v1047 = vmul.f32 %v632, %v632
      %v1048 = vmul.f32 %v791, %v791
      %v1049 = vmul.f32 %v793, %v793
      %v1050 = vmul.f32 %v952, %v952
      %v1051 = vmul.f32 %v954, %v954
      %v1052 = vmul.f32 %v636, %v636
      %v1053 = vmul.f32 %v638, %v638
      %v1054 = vmul.f32 %v797, %v797
      %v1055 = vmul.f32 %v799, %v799
      %v1056 = vmul.f32 %v958, %v958
      %v1057 = vmul.f32 %v960, %v960
      %v1058 = vmul.f32 %v642, %v642
      %v1059 = vmul.f32 %v644, %v644
      %v1060 = vmul.f32 %v803, %v803
      %v1061 = vmul.f32 %v805, %v805
      %v1062 = vmul.f32 %v964, %v964
      %v1063 = vmul.f32 %v966, %v966
      %v1064 = vmul.f32 %v648, %v648
      %v1065 = vmul.f32 %v650, %v650
      %v1066 = vmul.f32 %v809, %v809
      %v1067 = vmul.f32 %v811, %v811
      %v1068 = vmul.f32 %v970, %v970
      %v1069 = vmul.f32 %v972, %v972
      %v1070 = vmul.f32 %v654, %v654
      %v1071 = vmul.f32 %v656, %v656
      %v1072 = vmul.f32 %v815, %v815
      %v1073 = vmul.f32 %v817, %v817
      %v1074 = vmul.f32 %v976, %v976
      %v1075 = vmul.f32 %v978, %v978
      %v1076 = vmul.f32 %v660, %v660
      %v1077 = vmul.f32 %v662, %v662
      %v1078 = vmul.f32 %v821, %v821
      %v1079 = vmul.f32 %v823, %v823
      %v1080 = vmul.f32 %v982, %v982
      %v1081 = vmul.f32 %v984, %v984
      %v1082 = vmul.f32 %v666, %v666
      %v1083 = vmul.f32 %v668, %v668
      %v1084 = vmul.f32 %v827, %v827
      %v1085 = vmul.f32 %v829, %v829
      %v1086 = vmul.f32 %v988, %v988
      %v1087 = vmul.f32 %v990, %v990
      %v1088 = vmul.f32 %v672, %v672
      %v1089 = vmul.f32 %v674, %v674
      %v1090 = vmul.f32 %v833, %v833
      %v1091 = vmul.f32 %v835, %v835
      %v1092 = vmul.f32 %v994, %v994
      %v1093 = vmul.f32 %v996, %v996
      %v1094 = vmul.f32 %v678, %v678
      %v1095 = vmul.f32 %v680, %v680
      %v1096 = vmul.f32 %v839, %v839
      %v1097 = vmul.f32 %v841, %v841
      %v1098 = vmul.f32 %v1000, %v1000
      %v1099 = vmul.f32 %v1002, %v1002
      %v1100 = vld [vmem:[%s3] sm:$0xff]
      %v1101 = vld [vmem:[%s3 + $0x8] sm:$0xff]
      %v1102 = vld [vmem:[%s3 + $0x10] sm:$0xff]
      %v1103 = vld [vmem:[%s3 + $0x18] sm:$0xff]
      %v1104 = vld [vmem:[%s3 + $0x20] sm:$0xff]
      %v1105 = vld [vmem:[%s3 + $0x28] sm:$0xff]
      %v1106 = vld [vmem:[%s3 + $0x30] sm:$0xff]
      %v1107 = vld [vmem:[%s3 + $0x38] sm:$0xff]
      %v1108 = vld [vmem:[%s3 + $0x40] sm:$0xff]
      %v1109 = vld [vmem:[%s3 + $0x48] sm:$0xff]
      %v1110 = vld [vmem:[%s3 + $0x50] sm:$0xff]
      %v1111 = vld [vmem:[%s3 + $0x58] sm:$0xff]
      %v1112 = vld [vmem:[%s3 + $0x60] sm:$0xff]
      %v1113 = vld [vmem:[%s3 + $0x68] sm:$0xff]
      %v1114 = vld [vmem:[%s3 + $0x70] sm:$0xff]
      %v1115 = vld [vmem:[%s3 + $0x78] sm:$0xff]
      %v1116 = vld [vmem:[%s3 + $0x80] sm:$0xff]
      %v1117 = vld [vmem:[%s3 + $0x88] sm:$0xff]
      %v1118 = vld [vmem:[%s3 + $0x90] sm:$0xff]
      %v1119 = vld [vmem:[%s3 + $0x98] sm:$0xff]
      %v1120 = vld [vmem:[%s3 + $0xa0] sm:$0xff]
      %v1121 = vld [vmem:[%s3 + $0xa8] sm:$0xff]
      %v1122 = vld [vmem:[%s3 + $0xb0] sm:$0xff]
      %v1123 = vld [vmem:[%s3 + $0xb8] sm:$0xff]
      %v1124 = vld [vmem:[%s3 + $0xc0] sm:$0xff]
      %v1125 = vld [vmem:[%s3 + $0xc8] sm:$0xff]
      %v1126 = vld [vmem:[%s3 + $0xd0] sm:$0xff]
      %v1127 = vld [vmem:[%s3 + $0xd8] sm:$0xff]
      %v1128 = vld [vmem:[%s3 + $0xe0] sm:$0xff]
      %v1129 = vld [vmem:[%s3 + $0xe8] sm:$0xff]
      %v1130 = vld [vmem:[%s3 + $0xf0] sm:$0xff]
      %v1131 = vld [vmem:[%s3 + $0xf8] sm:$0xff]
      %v1132 = vld [vmem:[%s3 + $0x100] sm:$0xff]
      %v1133 = vld [vmem:[%s3 + $0x108] sm:$0xff]
      %v1134 = vld [vmem:[%s3 + $0x110] sm:$0xff]
      %v1135 = vld [vmem:[%s3 + $0x118] sm:$0xff]
      %v1136 = vld [vmem:[%s3 + $0x120] sm:$0xff]
      %v1137 = vld [vmem:[%s3 + $0x128] sm:$0xff]
      %v1138 = vld [vmem:[%s3 + $0x130] sm:$0xff]
      %v1139 = vld [vmem:[%s3 + $0x138] sm:$0xff]
      %v1140 = vld [vmem:[%s3 + $0x140] sm:$0xff]
      %v1141 = vld [vmem:[%s3 + $0x148] sm:$0xff]
      %v1142 = vld [vmem:[%s3 + $0x150] sm:$0xff]
      %v1143 = vld [vmem:[%s3 + $0x158] sm:$0xff]
      %v1144 = vld [vmem:[%s3 + $0x160] sm:$0xff]
      %v1145 = vld [vmem:[%s3 + $0x168] sm:$0xff]
      %v1146 = vld [vmem:[%s3 + $0x170] sm:$0xff]
      %v1147 = vld [vmem:[%s3 + $0x178] sm:$0xff]
      %v1148 = vld [vmem:[%s3 + $0x180] sm:$0xff]
      %v1149 = vld [vmem:[%s3 + $0x188] sm:$0xff]
      %v1150 = vld [vmem:[%s3 + $0x190] sm:$0xff]
      %v1151 = vld [vmem:[%s3 + $0x198] sm:$0xff]
      %v1152 = vld [vmem:[%s3 + $0x1a0] sm:$0xff]
      %v1153 = vld [vmem:[%s3 + $0x1a8] sm:$0xff]
      %v1154 = vld [vmem:[%s3 + $0x1b0] sm:$0xff]
      %v1155 = vld [vmem:[%s3 + $0x1b8] sm:$0xff]
      %v1156 = vld [vmem:[%s3 + $0x1c0] sm:$0xff]
      %v1157 = vld [vmem:[%s3 + $0x1c8] sm:$0xff]
      %v1158 = vld [vmem:[%s3 + $0x1d0] sm:$0xff]
      %v1159 = vld [vmem:[%s3 + $0x1d8] sm:$0xff]
      %v1160 = vld [vmem:[%s3 + $0x1e0] sm:$0xff]
      %v1161 = vld [vmem:[%s3 + $0x1e8] sm:$0xff]
      %v1162 = vld [vmem:[%s3 + $0x1f0] sm:$0xff]
      %v1163 = vld [vmem:[%s3 + $0x1f8] sm:$0xff]
      %v1164 = vld [vmem:[%s3 + $0x200] sm:$0xff]
      %v1165 = vld [vmem:[%s3 + $0x208] sm:$0xff]
      %v1166 = vld [vmem:[%s3 + $0x210] sm:$0xff]
      %v1167 = vld [vmem:[%s3 + $0x218] sm:$0xff]
      %v1168 = vld [vmem:[%s3 + $0x220] sm:$0xff]
      %v1169 = vld [vmem:[%s3 + $0x228] sm:$0xff]
      %v1170 = vld [vmem:[%s3 + $0x230] sm:$0xff]
      %v1171 = vld [vmem:[%s3 + $0x238] sm:$0xff]
      %v1172 = vld [vmem:[%s3 + $0x240] sm:$0xff]
      %v1173 = vld [vmem:[%s3 + $0x248] sm:$0xff]
      %v1174 = vld [vmem:[%s3 + $0x250] sm:$0xff]
      %v1175 = vld [vmem:[%s3 + $0x258] sm:$0xff]
      %v1176 = vld [vmem:[%s3 + $0x260] sm:$0xff]
      %v1177 = vld [vmem:[%s3 + $0x268] sm:$0xff]
      %v1178 = vld [vmem:[%s3 + $0x270] sm:$0xff]
      %v1179 = vld [vmem:[%s3 + $0x278] sm:$0xff]
      %v1180 = vld [vmem:[%s3 + $0x280] sm:$0xff]
      %v1181 = vld [vmem:[%s3 + $0x288] sm:$0xff]
      %v1182 = vld [vmem:[%s3 + $0x290] sm:$0xff]
      %v1183 = vld [vmem:[%s3 + $0x298] sm:$0xff]
      %v1184 = vld [vmem:[%s3 + $0x2a0] sm:$0xff]
      %v1185 = vld [vmem:[%s3 + $0x2a8] sm:$0xff]
      %v1186 = vld [vmem:[%s3 + $0x2b0] sm:$0xff]
      %v1187 = vld [vmem:[%s3 + $0x2b8] sm:$0xff]
      %v1188 = vld [vmem:[%s3 + $0x2c0] sm:$0xff]
      %v1189 = vld [vmem:[%s3 + $0x2c8] sm:$0xff]
      %v1190 = vld [vmem:[%s3 + $0x2d0] sm:$0xff]
      %v1191 = vld [vmem:[%s3 + $0x2d8] sm:$0xff]
      %v1192 = vld [vmem:[%s3 + $0x2e0] sm:$0xff]
      %v1193 = vld [vmem:[%s3 + $0x2e8] sm:$0xff]
      %v1194 = vld [vmem:[%s3 + $0x2f0] sm:$0xff]
      %v1195 = vld [vmem:[%s3 + $0x2f8] sm:$0xff]
      %1196 = vmatprep.subr.mxu0 0.0
      %1197 = vmatpush1.msra.mxu0 %v1115
      %1198 = vmatprep.subr.mxu0 0.0
      %1199 = vmatpush1.msra.mxu0 %v1114
      %1200 = vmatprep.subr.mxu0 0.0
      %1201 = vmatpush1.msra.mxu0 %v1113
      %1202 = vmatprep.subr.mxu0 0.0
      %1203 = vmatpush1.msra.mxu0 %v1112
      %1204 = vmatprep.subr.mxu0 0.0
      %1205 = vmatpush1.msra.mxu0 %v1111
      %1206 = vmatprep.subr.mxu0 0.0
      %1207 = vmatpush1.msra.mxu0 %v1110
      %1208 = vmatprep.subr.mxu0 0.0
      %1209 = vmatpush1.msra.mxu0 %v1109
      %1210 = vmatprep.subr.mxu0 0.0
      %1211 = vmatpush1.msra.mxu0 %v1108
      %1212 = vmatprep.subr.mxu0 0.0
      %1213 = vmatpush1.msra.mxu0 %v1107
      %1214 = vmatprep.subr.mxu0 0.0
      %1215 = vmatpush1.msra.mxu0 %v1106
      %1216 = vmatprep.subr.mxu0 0.0
      %1217 = vmatpush1.msra.mxu0 %v1105
      %1218 = vmatprep.subr.mxu0 0.0
      %1219 = vmatpush1.msra.mxu0 %v1104
      %1220 = vmatprep.subr.mxu0 0.0
      %1221 = vmatpush1.msra.mxu0 %v1103
      %1222 = vmatprep.subr.mxu0 0.0
      %1223 = vmatpush1.msra.mxu0 %v1102
      %1224 = vmatprep.subr.mxu0 0.0
      %1225 = vmatpush1.msra.mxu0 %v1101
      %1226 = vmatprep.subr.mxu0 0.0
      %1227 = vmatpush1.msra.mxu0 %v1100
      %1228 = vmatprep.subr.mxu0 0.0
      %1229 = vmatpush2.msra.mxu0 %v1131
      %1230 = vmatprep.subr.mxu0 0.0
      %1231 = vmatpush2.msra.mxu0 %v1130
      %1232 = vmatprep.subr.mxu0 0.0
      %1233 = vmatpush2.msra.mxu0 %v1129
      %1234 = vmatprep.subr.mxu0 0.0
      %1235 = vmatpush2.msra.mxu0 %v1128
      %1236 = vmatprep.subr.mxu0 0.0
      %1237 = vmatpush2.msra.mxu0 %v1127
      %1238 = vmatprep.subr.mxu0 0.0
      %1239 = vmatpush2.msra.mxu0 %v1126
      %1240 = vmatprep.subr.mxu0 0.0
      %1241 = vmatpush2.msra.mxu0 %v1125
      %1242 = vmatprep.subr.mxu0 0.0
      %1243 = vmatpush2.msra.mxu0 %v1124
      %1244 = vmatprep.subr.mxu0 0.0
      %1245 = vmatpush2.msra.mxu0 %v1123
      %1246 = vmatprep.subr.mxu0 0.0
      %1247 = vmatpush2.msra.mxu0 %v1122
      %1248 = vmatprep.subr.mxu0 0.0
      %1249 = vmatpush2.msra.mxu0 %v1121
      %1250 = vmatprep.subr.mxu0 0.0
      %1251 = vmatpush2.msra.mxu0 %v1120
      %1252 = vmatprep.subr.mxu0 0.0
      %1253 = vmatpush2.msra.mxu0 %v1119
      %1254 = vmatprep.subr.mxu0 0.0
      %1255 = vmatpush2.msra.mxu0 %v1118
      %1256 = vmatprep.subr.mxu0 0.0
      %1257 = vmatpush2.msra.mxu0 %v1117
      %1258 = vmatprep.subr.mxu0 0.0
      %1259 = vmatpush2.msra.mxu0 %v1116
      %1260 = vmatprep.mubr.f32.mxu0 %v1005
      %1261 = vmatmul.mubr.f32.gmra.mxu0 %v1004
      %v1262 = vpop.f32.mrf.mxu0
      %v1263 = vadd.f32 0.0, %v1262
      %v1264 = vpop.f32.mrf.mxu0
      %1265 = vmatprep.mubr.f32.mxu0 %v1011
      %1266 = vmatmul.mubr.f32.gmra.mxu0 %v1010
      %v1267 = vpop.f32.mrf.mxu0
      %v1268 = vadd.f32 0.0, %v1267
      %v1269 = vpop.f32.mrf.mxu0
      %1270 = vmatprep.mubr.f32.mxu0 %v1017
      %1271 = vmatmul.mubr.f32.gmra.mxu0 %v1016
      %v1272 = vpop.f32.mrf.mxu0
      %v1273 = vadd.f32 0.0, %v1272
      %v1274 = vpop.f32.mrf.mxu0
      %1275 = vmatprep.mubr.f32.mxu0 %v1023
      %1276 = vmatmul.mubr.f32.gmra.mxu0 %v1022
      %v1277 = vpop.f32.mrf.mxu0
      %v1278 = vadd.f32 0.0, %v1277
      %v1279 = vpop.f32.mrf.mxu0
      %1280 = vmatprep.mubr.f32.mxu0 %v1029
      %1281 = vmatmul.mubr.f32.gmra.mxu0 %v1028
      %v1282 = vpop.f32.mrf.mxu0
      %v1283 = vadd.f32 0.0, %v1282
      %v1284 = vpop.f32.mrf.mxu0
      %1285 = vmatprep.mubr.f32.mxu0 %v1035
      %1286 = vmatmul.mubr.f32.gmra.mxu0 %v1034
      %v1287 = vpop.f32.mrf.mxu0
      %v1288 = vadd.f32 0.0, %v1287
      %v1289 = vpop.f32.mrf.mxu0
      %1290 = vmatprep.mubr.f32.mxu0 %v1041
      %1291 = vmatmul.mubr.f32.gmra.mxu0 %v1040
      %v1292 = vpop.f32.mrf.mxu0
      %v1293 = vadd.f32 0.0, %v1292
      %v1294 = vpop.f32.mrf.mxu0
      %1295 = vmatprep.mubr.f32.mxu0 %v1047
      %1296 = vmatmul.mubr.f32.gmra.mxu0 %v1046
      %v1297 = vpop.f32.mrf.mxu0
      %v1298 = vadd.f32 0.0, %v1297
      %v1299 = vpop.f32.mrf.mxu0
      %1300 = vmatprep.mubr.f32.mxu0 %v1053
      %1301 = vmatmul.mubr.f32.gmra.mxu0 %v1052
      %v1302 = vpop.f32.mrf.mxu0
      %v1303 = vadd.f32 0.0, %v1302
      %v1304 = vpop.f32.mrf.mxu0
      %1305 = vmatprep.mubr.f32.mxu0 %v1059
      %1306 = vmatmul.mubr.f32.gmra.mxu0 %v1058
      %v1307 = vpop.f32.mrf.mxu0
      %v1308 = vadd.f32 0.0, %v1307
      %v1309 = vpop.f32.mrf.mxu0
      %1310 = vmatprep.mubr.f32.mxu0 %v1065
      %1311 = vmatmul.mubr.f32.gmra.mxu0 %v1064
      %v1312 = vpop.f32.mrf.mxu0
      %v1313 = vadd.f32 0.0, %v1312
      %v1314 = vpop.f32.mrf.mxu0
      %1315 = vmatprep.mubr.f32.mxu0 %v1071
      %1316 = vmatmul.mubr.f32.gmra.mxu0 %v1070
      %v1317 = vpop.f32.mrf.mxu0
      %v1318 = vadd.f32 0.0, %v1317
      %v1319 = vpop.f32.mrf.mxu0
      %1320 = vmatprep.mubr.f32.mxu0 %v1077
      %1321 = vmatmul.mubr.f32.gmra.mxu0 %v1076
      %v1322 = vpop.f32.mrf.mxu0
      %v1323 = vadd.f32 0.0, %v1322
      %v1324 = vpop.f32.mrf.mxu0
      %1325 = vmatprep.mubr.f32.mxu0 %v1083
      %1326 = vmatmul.mubr.f32.gmra.mxu0 %v1082
      %v1327 = vpop.f32.mrf.mxu0
      %v1328 = vadd.f32 0.0, %v1327
      %v1329 = vpop.f32.mrf.mxu0
      %1330 = vmatprep.mubr.f32.mxu0 %v1089
      %1331 = vmatmul.mubr.f32.gmra.mxu0 %v1088
      %v1332 = vpop.f32.mrf.mxu0
      %v1333 = vadd.f32 0.0, %v1332
      %v1334 = vpop.f32.mrf.mxu0
      %1335 = vmatprep.mubr.f32.mxu0 %v1095
      %1336 = vmatmul.mubr.f32.gmra.mxu0 %v1094
      %v1337 = vpop.f32.mrf.mxu0
      %v1338 = vadd.f32 0.0, %v1337
      %v1339 = vpop.f32.mrf.mxu0
      %1340 = vdwg.mxu0
      %1341 = vmatprep.subr.mxu0 0.0
      %1342 = vmatpush1.msra.mxu0 %v1147
      %1343 = vmatprep.subr.mxu0 0.0
      %1344 = vmatpush1.msra.mxu0 %v1146
      %1345 = vmatprep.subr.mxu0 0.0
      %1346 = vmatpush1.msra.mxu0 %v1145
      %1347 = vmatprep.subr.mxu0 0.0
      %1348 = vmatpush1.msra.mxu0 %v1144
      %1349 = vmatprep.subr.mxu0 0.0
      %1350 = vmatpush1.msra.mxu0 %v1143
      %1351 = vmatprep.subr.mxu0 0.0
      %1352 = vmatpush1.msra.mxu0 %v1142
      %1353 = vmatprep.subr.mxu0 0.0
      %1354 = vmatpush1.msra.mxu0 %v1141
      %1355 = vmatprep.subr.mxu0 0.0
      %1356 = vmatpush1.msra.mxu0 %v1140
      %1357 = vmatprep.subr.mxu0 0.0
      %1358 = vmatpush1.msra.mxu0 %v1139
      %1359 = vmatprep.subr.mxu0 0.0
      %1360 = vmatpush1.msra.mxu0 %v1138
      %1361 = vmatprep.subr.mxu0 0.0
      %1362 = vmatpush1.msra.mxu0 %v1137
      %1363 = vmatprep.subr.mxu0 0.0
      %1364 = vmatpush1.msra.mxu0 %v1136
      %1365 = vmatprep.subr.mxu0 0.0
      %1366 = vmatpush1.msra.mxu0 %v1135
      %1367 = vmatprep.subr.mxu0 0.0
      %1368 = vmatpush1.msra.mxu0 %v1134
      %1369 = vmatprep.subr.mxu0 0.0
      %1370 = vmatpush1.msra.mxu0 %v1133
      %1371 = vmatprep.subr.mxu0 0.0
      %1372 = vmatpush1.msra.mxu0 %v1132
      %1373 = vmatprep.subr.mxu0 0.0
      %1374 = vmatpush2.msra.mxu0 %v1163
      %1375 = vmatprep.subr.mxu0 0.0
      %1376 = vmatpush2.msra.mxu0 %v1162
      %1377 = vmatprep.subr.mxu0 0.0
      %1378 = vmatpush2.msra.mxu0 %v1161
      %1379 = vmatprep.subr.mxu0 0.0
      %1380 = vmatpush2.msra.mxu0 %v1160
      %1381 = vmatprep.subr.mxu0 0.0
      %1382 = vmatpush2.msra.mxu0 %v1159
      %1383 = vmatprep.subr.mxu0 0.0
      %1384 = vmatpush2.msra.mxu0 %v1158
      %1385 = vmatprep.subr.mxu0 0.0
      %1386 = vmatpush2.msra.mxu0 %v1157
      %1387 = vmatprep.subr.mxu0 0.0
      %1388 = vmatpush2.msra.mxu0 %v1156
      %1389 = vmatprep.subr.mxu0 0.0
      %1390 = vmatpush2.msra.mxu0 %v1155
      %1391 = vmatprep.subr.mxu0 0.0
      %1392 = vmatpush2.msra.mxu0 %v1154
      %1393 = vmatprep.subr.mxu0 0.0
      %1394 = vmatpush2.msra.mxu0 %v1153
      %1395 = vmatprep.subr.mxu0 0.0
      %1396 = vmatpush2.msra.mxu0 %v1152
      %1397 = vmatprep.subr.mxu0 0.0
      %1398 = vmatpush2.msra.mxu0 %v1151
      %1399 = vmatprep.subr.mxu0 0.0
      %1400 = vmatpush2.msra.mxu0 %v1150
      %1401 = vmatprep.subr.mxu0 0.0
      %1402 = vmatpush2.msra.mxu0 %v1149
      %1403 = vmatprep.subr.mxu0 0.0
      %1404 = vmatpush2.msra.mxu0 %v1148
      %1405 = vmatprep.mubr.f32.mxu0 %v1007
      %1406 = vmatmul.mubr.f32.gmra.mxu0 %v1006
      %v1407 = vpop.f32.mrf.mxu0
      %v1408 = vadd.f32 %v1263, %v1407
      %v1409 = vpop.f32.mrf.mxu0
      %1410 = vmatprep.mubr.f32.mxu0 %v1013
      %1411 = vmatmul.mubr.f32.gmra.mxu0 %v1012
      %v1412 = vpop.f32.mrf.mxu0
      %v1413 = vadd.f32 %v1268, %v1412
      %v1414 = vpop.f32.mrf.mxu0
      %1415 = vmatprep.mubr.f32.mxu0 %v1019
      %1416 = vmatmul.mubr.f32.gmra.mxu0 %v1018
      %v1417 = vpop.f32.mrf.mxu0
      %v1418 = vadd.f32 %v1273, %v1417
      %v1419 = vpop.f32.mrf.mxu0
      %1420 = vmatprep.mubr.f32.mxu0 %v1025
      %1421 = vmatmul.mubr.f32.gmra.mxu0 %v1024
      %v1422 = vpop.f32.mrf.mxu0
      %v1423 = vadd.f32 %v1278, %v1422
      %v1424 = vpop.f32.mrf.mxu0
      %1425 = vmatprep.mubr.f32.mxu0 %v1031
      %1426 = vmatmul.mubr.f32.gmra.mxu0 %v1030
      %v1427 = vpop.f32.mrf.mxu0
      %v1428 = vadd.f32 %v1283, %v1427
      %v1429 = vpop.f32.mrf.mxu0
      %1430 = vmatprep.mubr.f32.mxu0 %v1037
      %1431 = vmatmul.mubr.f32.gmra.mxu0 %v1036
      %v1432 = vpop.f32.mrf.mxu0
      %v1433 = vadd.f32 %v1288, %v1432
      %v1434 = vpop.f32.mrf.mxu0
      %1435 = vmatprep.mubr.f32.mxu0 %v1043
      %1436 = vmatmul.mubr.f32.gmra.mxu0 %v1042
      %v1437 = vpop.f32.mrf.mxu0
      %v1438 = vadd.f32 %v1293, %v1437
      %v1439 = vpop.f32.mrf.mxu0
      %1440 = vmatprep.mubr.f32.mxu0 %v1049
      %1441 = vmatmul.mubr.f32.gmra.mxu0 %v1048
      %v1442 = vpop.f32.mrf.mxu0
      %v1443 = vadd.f32 %v1298, %v1442
      %v1444 = vpop.f32.mrf.mxu0
      %1445 = vmatprep.mubr.f32.mxu0 %v1055
      %1446 = vmatmul.mubr.f32.gmra.mxu0 %v1054
      %v1447 = vpop.f32.mrf.mxu0
      %v1448 = vadd.f32 %v1303, %v1447
      %v1449 = vpop.f32.mrf.mxu0
      %1450 = vmatprep.mubr.f32.mxu0 %v1061
      %1451 = vmatmul.mubr.f32.gmra.mxu0 %v1060
      %v1452 = vpop.f32.mrf.mxu0
      %v1453 = vadd.f32 %v1308, %v1452
      %v1454 = vpop.f32.mrf.mxu0
      %1455 = vmatprep.mubr.f32.mxu0 %v1067
      %1456 = vmatmul.mubr.f32.gmra.mxu0 %v1066
      %v1457 = vpop.f32.mrf.mxu0
      %v1458 = vadd.f32 %v1313, %v1457
      %v1459 = vpop.f32.mrf.mxu0
      %1460 = vmatprep.mubr.f32.mxu0 %v1073
      %1461 = vmatmul.mubr.f32.gmra.mxu0 %v1072
      %v1462 = vpop.f32.mrf.mxu0
      %v1463 = vadd.f32 %v1318, %v1462
      %v1464 = vpop.f32.mrf.mxu0
      %1465 = vmatprep.mubr.f32.mxu0 %v1079
      %1466 = vmatmul.mubr.f32.gmra.mxu0 %v1078
      %v1467 = vpop.f32.mrf.mxu0
      %v1468 = vadd.f32 %v1323, %v1467
      %v1469 = vpop.f32.mrf.mxu0
      %1470 = vmatprep.mubr.f32.mxu0 %v1085
      %1471 = vmatmul.mubr.f32.gmra.mxu0 %v1084
      %v1472 = vpop.f32.mrf.mxu0
      %v1473 = vadd.f32 %v1328, %v1472
      %v1474 = vpop.f32.mrf.mxu0
      %1475 = vmatprep.mubr.f32.mxu0 %v1091
      %1476 = vmatmul.mubr.f32.gmra.mxu0 %v1090
      %v1477 = vpop.f32.mrf.mxu0
      %v1478 = vadd.f32 %v1333, %v1477
      %v1479 = vpop.f32.mrf.mxu0
      %1480 = vmatprep.mubr.f32.mxu0 %v1097
      %1481 = vmatmul.mubr.f32.gmra.mxu0 %v1096
      %v1482 = vpop.f32.mrf.mxu0
      %v1483 = vadd.f32 %v1338, %v1482
      %v1484 = vpop.f32.mrf.mxu0
      %1485 = vdwg.mxu0
      %1486 = vmatprep.subr.mxu0 0.0
      %1487 = vmatpush1.msra.mxu0 %v1179
      %1488 = vmatprep.subr.mxu0 0.0
      %1489 = vmatpush1.msra.mxu0 %v1178
      %1490 = vmatprep.subr.mxu0 0.0
      %1491 = vmatpush1.msra.mxu0 %v1177
      %1492 = vmatprep.subr.mxu0 0.0
      %1493 = vmatpush1.msra.mxu0 %v1176
      %1494 = vmatprep.subr.mxu0 0.0
      %1495 = vmatpush1.msra.mxu0 %v1175
      %1496 = vmatprep.subr.mxu0 0.0
      %1497 = vmatpush1.msra.mxu0 %v1174
      %1498 = vmatprep.subr.mxu0 0.0
      %1499 = vmatpush1.msra.mxu0 %v1173
      %1500 = vmatprep.subr.mxu0 0.0
      %1501 = vmatpush1.msra.mxu0 %v1172
      %1502 = vmatprep.subr.mxu0 0.0
      %1503 = vmatpush1.msra.mxu0 %v1171
      %1504 = vmatprep.subr.mxu0 0.0
      %1505 = vmatpush1.msra.mxu0 %v1170
      %1506 = vmatprep.subr.mxu0 0.0
      %1507 = vmatpush1.msra.mxu0 %v1169
      %1508 = vmatprep.subr.mxu0 0.0
      %1509 = vmatpush1.msra.mxu0 %v1168
      %1510 = vmatprep.subr.mxu0 0.0
      %1511 = vmatpush1.msra.mxu0 %v1167
      %1512 = vmatprep.subr.mxu0 0.0
      %1513 = vmatpush1.msra.mxu0 %v1166
      %1514 = vmatprep.subr.mxu0 0.0
      %1515 = vmatpush1.msra.mxu0 %v1165
      %1516 = vmatprep.subr.mxu0 0.0
      %1517 = vmatpush1.msra.mxu0 %v1164
      %1518 = vmatprep.subr.mxu0 0.0
      %1519 = vmatpush2.msra.mxu0 %v1195
      %1520 = vmatprep.subr.mxu0 0.0
      %1521 = vmatpush2.msra.mxu0 %v1194
      %1522 = vmatprep.subr.mxu0 0.0
      %1523 = vmatpush2.msra.mxu0 %v1193
      %1524 = vmatprep.subr.mxu0 0.0
      %1525 = vmatpush2.msra.mxu0 %v1192
      %1526 = vmatprep.subr.mxu0 0.0
      %1527 = vmatpush2.msra.mxu0 %v1191
      %1528 = vmatprep.subr.mxu0 0.0
      %1529 = vmatpush2.msra.mxu0 %v1190
      %1530 = vmatprep.subr.mxu0 0.0
      %1531 = vmatpush2.msra.mxu0 %v1189
      %1532 = vmatprep.subr.mxu0 0.0
      %1533 = vmatpush2.msra.mxu0 %v1188
      %1534 = vmatprep.subr.mxu0 0.0
      %1535 = vmatpush2.msra.mxu0 %v1187
      %1536 = vmatprep.subr.mxu0 0.0
      %1537 = vmatpush2.msra.mxu0 %v1186
      %1538 = vmatprep.subr.mxu0 0.0
      %1539 = vmatpush2.msra.mxu0 %v1185
      %1540 = vmatprep.subr.mxu0 0.0
      %1541 = vmatpush2.msra.mxu0 %v1184
      %1542 = vmatprep.subr.mxu0 0.0
      %1543 = vmatpush2.msra.mxu0 %v1183
      %1544 = vmatprep.subr.mxu0 0.0
      %1545 = vmatpush2.msra.mxu0 %v1182
      %1546 = vmatprep.subr.mxu0 0.0
      %1547 = vmatpush2.msra.mxu0 %v1181
      %1548 = vmatprep.subr.mxu0 0.0
      %1549 = vmatpush2.msra.mxu0 %v1180
      %1550 = vmatprep.mubr.f32.mxu0 %v1009
      %1551 = vmatmul.mubr.f32.gmra.mxu0 %v1008
      %v1552 = vpop.f32.mrf.mxu0
      %v1553 = vadd.f32 %v1408, %v1552
      %v1554 = vpop.f32.mrf.mxu0
      %1555 = vmatprep.mubr.f32.mxu0 %v1015
      %1556 = vmatmul.mubr.f32.gmra.mxu0 %v1014
      %v1557 = vpop.f32.mrf.mxu0
      %v1558 = vadd.f32 %v1413, %v1557
      %v1559 = vpop.f32.mrf.mxu0
      %1560 = vmatprep.mubr.f32.mxu0 %v1021
      %1561 = vmatmul.mubr.f32.gmra.mxu0 %v1020
      %v1562 = vpop.f32.mrf.mxu0
      %v1563 = vadd.f32 %v1418, %v1562
      %v1564 = vpop.f32.mrf.mxu0
      %1565 = vmatprep.mubr.f32.mxu0 %v1027
      %1566 = vmatmul.mubr.f32.gmra.mxu0 %v1026
      %v1567 = vpop.f32.mrf.mxu0
      %v1568 = vadd.f32 %v1423, %v1567
      %v1569 = vpop.f32.mrf.mxu0
      %1570 = vmatprep.mubr.f32.mxu0 %v1033
      %1571 = vmatmul.mubr.f32.gmra.mxu0 %v1032
      %v1572 = vpop.f32.mrf.mxu0
      %v1573 = vadd.f32 %v1428, %v1572
      %v1574 = vpop.f32.mrf.mxu0
      %1575 = vmatprep.mubr.f32.mxu0 %v1039
      %1576 = vmatmul.mubr.f32.gmra.mxu0 %v1038
      %v1577 = vpop.f32.mrf.mxu0
      %v1578 = vadd.f32 %v1433, %v1577
      %v1579 = vpop.f32.mrf.mxu0
      %1580 = vmatprep.mubr.f32.mxu0 %v1045
      %1581 = vmatmul.mubr.f32.gmra.mxu0 %v1044
      %v1582 = vpop.f32.mrf.mxu0
      %v1583 = vadd.f32 %v1438, %v1582
      %v1584 = vpop.f32.mrf.mxu0
      %1585 = vmatprep.mubr.f32.mxu0 %v1051
      %1586 = vmatmul.mubr.f32.gmra.mxu0 %v1050
      %v1587 = vpop.f32.mrf.mxu0
      %v1588 = vadd.f32 %v1443, %v1587
      %v1589 = vpop.f32.mrf.mxu0
      %1590 = vmatprep.mubr.f32.mxu0 %v1057
      %1591 = vmatmul.mubr.f32.gmra.mxu0 %v1056
      %v1592 = vpop.f32.mrf.mxu0
      %v1593 = vadd.f32 %v1448, %v1592
      %v1594 = vpop.f32.mrf.mxu0
      %1595 = vmatprep.mubr.f32.mxu0 %v1063
      %1596 = vmatmul.mubr.f32.gmra.mxu0 %v1062
      %v1597 = vpop.f32.mrf.mxu0
      %v1598 = vadd.f32 %v1453, %v1597
      %v1599 = vpop.f32.mrf.mxu0
      %1600 = vmatprep.mubr.f32.mxu0 %v1069
      %1601 = vmatmul.mubr.f32.gmra.mxu0 %v1068
      %v1602 = vpop.f32.mrf.mxu0
      %v1603 = vadd.f32 %v1458, %v1602
      %v1604 = vpop.f32.mrf.mxu0
      %1605 = vmatprep.mubr.f32.mxu0 %v1075
      %1606 = vmatmul.mubr.f32.gmra.mxu0 %v1074
      %v1607 = vpop.f32.mrf.mxu0
      %v1608 = vadd.f32 %v1463, %v1607
      %v1609 = vpop.f32.mrf.mxu0
      %1610 = vmatprep.mubr.f32.mxu0 %v1081
      %1611 = vmatmul.mubr.f32.gmra.mxu0 %v1080
      %v1612 = vpop.f32.mrf.mxu0
      %v1613 = vadd.f32 %v1468, %v1612
      %v1614 = vpop.f32.mrf.mxu0
      %1615 = vmatprep.mubr.f32.mxu0 %v1087
      %1616 = vmatmul.mubr.f32.gmra.mxu0 %v1086
      %v1617 = vpop.f32.mrf.mxu0
      %v1618 = vadd.f32 %v1473, %v1617
      %v1619 = vpop.f32.mrf.mxu0
      %1620 = vmatprep.mubr.f32.mxu0 %v1093
      %1621 = vmatmul.mubr.f32.gmra.mxu0 %v1092
      %v1622 = vpop.f32.mrf.mxu0
      %v1623 = vadd.f32 %v1478, %v1622
      %v1624 = vpop.f32.mrf.mxu0
      %1625 = vmatprep.mubr.f32.mxu0 %v1099
      %1626 = vmatmul.mubr.f32.gmra.mxu0 %v1098
      %v1627 = vpop.f32.mrf.mxu0
      %v1628 = vadd.f32 %v1483, %v1627
      %v1629 = vpop.f32.mrf.mxu0
      %1630 = vdwg.mxu0
      %v1631 = vmax.f32 %v1553, 1e-30
      %v1632 = vmax.f32 %v1558, 1e-30
      %v1633 = vmax.f32 %v1563, 1e-30
      %v1634 = vmax.f32 %v1568, 1e-30
      %v1635 = vmax.f32 %v1573, 1e-30
      %v1636 = vmax.f32 %v1578, 1e-30
      %v1637 = vmax.f32 %v1583, 1e-30
      %v1638 = vmax.f32 %v1588, 1e-30
      %v1639 = vmax.f32 %v1593, 1e-30
      %v1640 = vmax.f32 %v1598, 1e-30
      %v1641 = vmax.f32 %v1603, 1e-30
      %v1642 = vmax.f32 %v1608, 1e-30
      %v1643 = vmax.f32 %v1613, 1e-30
      %v1644 = vmax.f32 %v1618, 1e-30
      %v1645 = vmax.f32 %v1623, 1e-30
      %v1646 = vmax.f32 %v1628, 1e-30
      %v1647 = vlog2.pop %v1631
      %v1648 = vmul.f32 %v1647, 0.6931472
      %v1649 = vlog2.pop %v1632
      %v1650 = vmul.f32 %v1649, 0.6931472
      %v1651 = vlog2.pop %v1633
      %v1652 = vmul.f32 %v1651, 0.6931472
      %v1653 = vlog2.pop %v1634
      %v1654 = vmul.f32 %v1653, 0.6931472
      %v1655 = vlog2.pop %v1635
      %v1656 = vmul.f32 %v1655, 0.6931472
      %v1657 = vlog2.pop %v1636
      %v1658 = vmul.f32 %v1657, 0.6931472
      %v1659 = vlog2.pop %v1637
      %v1660 = vmul.f32 %v1659, 0.6931472
      %v1661 = vlog2.pop %v1638
      %v1662 = vmul.f32 %v1661, 0.6931472
      %v1663 = vlog2.pop %v1639
      %v1664 = vmul.f32 %v1663, 0.6931472
      %v1665 = vlog2.pop %v1640
      %v1666 = vmul.f32 %v1665, 0.6931472
      %v1667 = vlog2.pop %v1641
      %v1668 = vmul.f32 %v1667, 0.6931472
      %v1669 = vlog2.pop %v1642
      %v1670 = vmul.f32 %v1669, 0.6931472
      %v1671 = vlog2.pop %v1643
      %v1672 = vmul.f32 %v1671, 0.6931472
      %v1673 = vlog2.pop %v1644
      %v1674 = vmul.f32 %v1673, 0.6931472
      %v1675 = vlog2.pop %v1645
      %v1676 = vmul.f32 %v1675, 0.6931472
      %v1677 = vlog2.pop %v1646
      %v1678 = vmul.f32 %v1677, 0.6931472
      %v1679 = vld [vmem:[%s4] sm:$0xff]
      %v1680 = vld [vmem:[%s4 + $0x8] sm:$0xff]
      %v1681 = vld [vmem:[%s4 + $0x10] sm:$0xff]
      %v1682 = vld [vmem:[%s4 + $0x18] sm:$0xff]
      %v1683 = vld [vmem:[%s4 + $0x20] sm:$0xff]
      %v1684 = vld [vmem:[%s4 + $0x28] sm:$0xff]
      %v1685 = vld [vmem:[%s4 + $0x30] sm:$0xff]
      %v1686 = vld [vmem:[%s4 + $0x38] sm:$0xff]
      %v1687 = vld [vmem:[%s4 + $0x40] sm:$0xff]
      %v1688 = vld [vmem:[%s4 + $0x48] sm:$0xff]
      %v1689 = vld [vmem:[%s4 + $0x50] sm:$0xff]
      %v1690 = vld [vmem:[%s4 + $0x58] sm:$0xff]
      %v1691 = vld [vmem:[%s4 + $0x60] sm:$0xff]
      %v1692 = vld [vmem:[%s4 + $0x68] sm:$0xff]
      %v1693 = vld [vmem:[%s4 + $0x70] sm:$0xff]
      %v1694 = vld [vmem:[%s4 + $0x78] sm:$0xff]
      %v1695 = vmul.f32 %v1648, %v1679
      %v1696 = vmul.f32 %v1650, %v1680
      %v1697 = vmul.f32 %v1652, %v1681
      %v1698 = vmul.f32 %v1654, %v1682
      %v1699 = vmul.f32 %v1656, %v1683
      %v1700 = vmul.f32 %v1658, %v1684
      %v1701 = vmul.f32 %v1660, %v1685
      %v1702 = vmul.f32 %v1662, %v1686
      %v1703 = vmul.f32 %v1664, %v1687
      %v1704 = vmul.f32 %v1666, %v1688
      %v1705 = vmul.f32 %v1668, %v1689
      %v1706 = vmul.f32 %v1670, %v1690
      %v1707 = vmul.f32 %v1672, %v1691
      %v1708 = vmul.f32 %v1674, %v1692
      %v1709 = vmul.f32 %v1676, %v1693
      %v1710 = vmul.f32 %v1678, %v1694
      %1711 = vadd.xlane.f32.xlu0 %v1695
      %v1712 = vpop.xlane.xlu0 %1711
      %1713 = vadd.xlane.f32.xlu0 %v1696
      %v1714 = vpop.xlane.xlu0 %1713
      %1715 = vadd.xlane.f32.xlu0 %v1697
      %v1716 = vpop.xlane.xlu0 %1715
      %1717 = vadd.xlane.f32.xlu0 %v1698
      %v1718 = vpop.xlane.xlu0 %1717
      %1719 = vadd.xlane.f32.xlu0 %v1699
      %v1720 = vpop.xlane.xlu0 %1719
      %1721 = vadd.xlane.f32.xlu0 %v1700
      %v1722 = vpop.xlane.xlu0 %1721
      %1723 = vadd.xlane.f32.xlu0 %v1701
      %v1724 = vpop.xlane.xlu0 %1723
      %1725 = vadd.xlane.f32.xlu0 %v1702
      %v1726 = vpop.xlane.xlu0 %1725
      %1727 = vadd.xlane.f32.xlu0 %v1703
      %v1728 = vpop.xlane.xlu0 %1727
      %1729 = vadd.xlane.f32.xlu0 %v1704
      %v1730 = vpop.xlane.xlu0 %1729
      %1731 = vadd.xlane.f32.xlu0 %v1705
      %v1732 = vpop.xlane.xlu0 %1731
      %1733 = vadd.xlane.f32.xlu0 %v1706
      %v1734 = vpop.xlane.xlu0 %1733
      %1735 = vadd.xlane.f32.xlu0 %v1707
      %v1736 = vpop.xlane.xlu0 %1735
      %1737 = vadd.xlane.f32.xlu0 %v1708
      %v1738 = vpop.xlane.xlu0 %1737
      %1739 = vadd.xlane.f32.xlu0 %v1709
      %v1740 = vpop.xlane.xlu0 %1739
      %1741 = vadd.xlane.f32.xlu0 %v1710
      %v1742 = vpop.xlane.xlu0 %1741
      %s1743 = scalar_lea.vmem %s4, 128
      %v1744 = vld [vmem:[%s1743] sm:$0xff]
      %v1745 = vld [vmem:[%s1743 + $0x8] sm:$0xff]
      %v1746 = vld [vmem:[%s1743 + $0x10] sm:$0xff]
      %v1747 = vld [vmem:[%s1743 + $0x18] sm:$0xff]
      %v1748 = vld [vmem:[%s1743 + $0x20] sm:$0xff]
      %v1749 = vld [vmem:[%s1743 + $0x28] sm:$0xff]
      %v1750 = vld [vmem:[%s1743 + $0x30] sm:$0xff]
      %v1751 = vld [vmem:[%s1743 + $0x38] sm:$0xff]
      %v1752 = vld [vmem:[%s1743 + $0x40] sm:$0xff]
      %v1753 = vld [vmem:[%s1743 + $0x48] sm:$0xff]
      %v1754 = vld [vmem:[%s1743 + $0x50] sm:$0xff]
      %v1755 = vld [vmem:[%s1743 + $0x58] sm:$0xff]
      %v1756 = vld [vmem:[%s1743 + $0x60] sm:$0xff]
      %v1757 = vld [vmem:[%s1743 + $0x68] sm:$0xff]
      %v1758 = vld [vmem:[%s1743 + $0x70] sm:$0xff]
      %v1759 = vld [vmem:[%s1743 + $0x78] sm:$0xff]
      %v1760 = vmul.f32 %v1648, %v1744
      %v1761 = vmul.f32 %v1650, %v1745
      %v1762 = vmul.f32 %v1652, %v1746
      %v1763 = vmul.f32 %v1654, %v1747
      %v1764 = vmul.f32 %v1656, %v1748
      %v1765 = vmul.f32 %v1658, %v1749
      %v1766 = vmul.f32 %v1660, %v1750
      %v1767 = vmul.f32 %v1662, %v1751
      %v1768 = vmul.f32 %v1664, %v1752
      %v1769 = vmul.f32 %v1666, %v1753
      %v1770 = vmul.f32 %v1668, %v1754
      %v1771 = vmul.f32 %v1670, %v1755
      %v1772 = vmul.f32 %v1672, %v1756
      %v1773 = vmul.f32 %v1674, %v1757
      %v1774 = vmul.f32 %v1676, %v1758
      %v1775 = vmul.f32 %v1678, %v1759
      %1776 = vadd.xlane.f32.xlu0 %v1760
      %v1777 = vpop.xlane.xlu0 %1776
      %1778 = vadd.xlane.f32.xlu0 %v1761
      %v1779 = vpop.xlane.xlu0 %1778
      %1780 = vadd.xlane.f32.xlu0 %v1762
      %v1781 = vpop.xlane.xlu0 %1780
      %1782 = vadd.xlane.f32.xlu0 %v1763
      %v1783 = vpop.xlane.xlu0 %1782
      %1784 = vadd.xlane.f32.xlu0 %v1764
      %v1785 = vpop.xlane.xlu0 %1784
      %1786 = vadd.xlane.f32.xlu0 %v1765
      %v1787 = vpop.xlane.xlu0 %1786
      %1788 = vadd.xlane.f32.xlu0 %v1766
      %v1789 = vpop.xlane.xlu0 %1788
      %1790 = vadd.xlane.f32.xlu0 %v1767
      %v1791 = vpop.xlane.xlu0 %1790
      %1792 = vadd.xlane.f32.xlu0 %v1768
      %v1793 = vpop.xlane.xlu0 %1792
      %1794 = vadd.xlane.f32.xlu0 %v1769
      %v1795 = vpop.xlane.xlu0 %1794
      %1796 = vadd.xlane.f32.xlu0 %v1770
      %v1797 = vpop.xlane.xlu0 %1796
      %1798 = vadd.xlane.f32.xlu0 %v1771
      %v1799 = vpop.xlane.xlu0 %1798
      %1800 = vadd.xlane.f32.xlu0 %v1772
      %v1801 = vpop.xlane.xlu0 %1800
      %1802 = vadd.xlane.f32.xlu0 %v1773
      %v1803 = vpop.xlane.xlu0 %1802
      %1804 = vadd.xlane.f32.xlu0 %v1774
      %v1805 = vpop.xlane.xlu0 %1804
      %1806 = vadd.xlane.f32.xlu0 %v1775
      %v1807 = vpop.xlane.xlu0 %1806
      %vm1808 = vcmask 7168
      %v1809 = vsel %vm1808, %v1712, %v1777
      %v1810 = vsel %vm1808, %v1714, %v1779
      %v1811 = vsel %vm1808, %v1716, %v1781
      %v1812 = vsel %vm1808, %v1718, %v1783
      %v1813 = vsel %vm1808, %v1720, %v1785
      %v1814 = vsel %vm1808, %v1722, %v1787
      %v1815 = vsel %vm1808, %v1724, %v1789
      %v1816 = vsel %vm1808, %v1726, %v1791
      %v1817 = vsel %vm1808, %v1728, %v1793
      %v1818 = vsel %vm1808, %v1730, %v1795
      %v1819 = vsel %vm1808, %v1732, %v1797
      %v1820 = vsel %vm1808, %v1734, %v1799
      %v1821 = vsel %vm1808, %v1736, %v1801
      %v1822 = vsel %vm1808, %v1738, %v1803
      %v1823 = vsel %vm1808, %v1740, %v1805
      %v1824 = vsel %vm1808, %v1742, %v1807
      %v1825 = vld [vmem:[%s5] sm:$0xf]
      %v1826 = vld [vmem:[%s6] sm:$0x1]
      %v1828 = vlaneseq
      %v1829 = vshrl.u32 %v1828, 7
      %v1830 = vsub.s32 0, %v1829
      %v1831 = vrot.slane %v1826, %v1830
      %1833 = vmatprep.subr.mxu0 0.0
      %1834 = vmatpush1.msra.mxu0 %v1824
      %1835 = vmatprep.subr.mxu0 0.0
      %1836 = vmatpush1.msra.mxu0 %v1823
      %1837 = vmatprep.subr.mxu0 0.0
      %1838 = vmatpush1.msra.mxu0 %v1822
      %1839 = vmatprep.subr.mxu0 0.0
      %1840 = vmatpush1.msra.mxu0 %v1821
      %1841 = vmatprep.subr.mxu0 0.0
      %1842 = vmatpush1.msra.mxu0 %v1820
      %1843 = vmatprep.subr.mxu0 0.0
      %1844 = vmatpush1.msra.mxu0 %v1819
      %1845 = vmatprep.subr.mxu0 0.0
      %1846 = vmatpush1.msra.mxu0 %v1818
      %1847 = vmatprep.subr.mxu0 0.0
      %1848 = vmatpush1.msra.mxu0 %v1817
      %1849 = vmatprep.subr.mxu0 0.0
      %1850 = vmatpush1.msra.mxu0 %v1816
      %1851 = vmatprep.subr.mxu0 0.0
      %1852 = vmatpush1.msra.mxu0 %v1815
      %1853 = vmatprep.subr.mxu0 0.0
      %1854 = vmatpush1.msra.mxu0 %v1814
      %1855 = vmatprep.subr.mxu0 0.0
      %1856 = vmatpush1.msra.mxu0 %v1813
      %1857 = vmatprep.subr.mxu0 0.0
      %1858 = vmatpush1.msra.mxu0 %v1812
      %1859 = vmatprep.subr.mxu0 0.0
      %1860 = vmatpush1.msra.mxu0 %v1811
      %1861 = vmatprep.subr.mxu0 0.0
      %1862 = vmatpush1.msra.mxu0 %v1810
      %1863 = vmatprep.subr.mxu0 0.0
      %1864 = vmatpush1.msra.mxu0 %v1809
      %1865 = vmatprep.subr.mxu0 0.0
      %1866 = vmatpush2.msra.mxu0 0.0
      %1867 = vmatprep.subr.mxu0 0.0
      %1868 = vmatpush2.msra.mxu0 0.0
      %1869 = vmatprep.subr.mxu0 0.0
      %1870 = vmatpush2.msra.mxu0 0.0
      %1871 = vmatprep.subr.mxu0 0.0
      %1872 = vmatpush2.msra.mxu0 0.0
      %1873 = vmatprep.subr.mxu0 0.0
      %1874 = vmatpush2.msra.mxu0 0.0
      %1875 = vmatprep.subr.mxu0 0.0
      %1876 = vmatpush2.msra.mxu0 0.0
      %1877 = vmatprep.subr.mxu0 0.0
      %1878 = vmatpush2.msra.mxu0 0.0
      %1879 = vmatprep.subr.mxu0 0.0
      %1880 = vmatpush2.msra.mxu0 0.0
      %1881 = vmatprep.subr.mxu0 0.0
      %1882 = vmatpush2.msra.mxu0 0.0
      %1883 = vmatprep.subr.mxu0 0.0
      %1884 = vmatpush2.msra.mxu0 0.0
      %1885 = vmatprep.subr.mxu0 0.0
      %1886 = vmatpush2.msra.mxu0 0.0
      %1887 = vmatprep.subr.mxu0 0.0
      %1888 = vmatpush2.msra.mxu0 0.0
      %1889 = vmatprep.subr.mxu0 0.0
      %1890 = vmatpush2.msra.mxu0 0.0
      %1891 = vmatprep.subr.mxu0 0.0
      %1892 = vmatpush2.msra.mxu0 0.0
      %1893 = vmatprep.subr.mxu0 0.0
      %1894 = vmatpush2.msra.mxu0 0.0
      %1895 = vmatprep.subr.mxu0 0.0
      %1896 = vmatpush2.msra.mxu0 0.0
      %1897 = vmatprep.mubr.f32.mxu0 0.0
      %1898 = vmatmul.mubr.f32.gmra.mxu0 %v1825
      %v1899 = vpop.f32.mrf.mxu0
      %v1900 = vadd.f32 %v1831, %v1899
      %v1901 = vpop.f32.mrf.mxu0
      %1902 = vdwg.mxu0
      %vm1903 = vcmask 11264
      %1904 = vst.msk [vmem:[%s281] sm:$0xf] %vm1903, %v1900
      %p1905 = scmp.lt.s32.totalorder %s18, 1
      %s1906 = scalar_select %p1905, %s18, 1
      %s1907 = smul.addr %s1906, 4
      %s1908 = scalar_lea.vmem %s7, %s1907
      // Predicated region
      $region49: #{shallow_convnet_forward.1} parent=47 // pred_check
        %p1909 = pneg %p188
      $region50: #{shallow_convnet_forward.1} parent=47 // pred_check_branch
        %1911 = sbr.rel (%p1909) target = $region52
      $region51: #{shallow_convnet_forward.1} parent=47 // pred_region
        _
      $region52: #{shallow_convnet_forward.1} parent=47 // pred_fallthru
        _
    $region48: #{shallow_convnet_forward.1} parent=5 // pred_fallthru
      _
    %p1912 = scmp.le.s32.totalorder 2, %s13
    // Predicated region
    $region53: #{shallow_convnet_forward.1} parent=5 // pred_check
      %p1913 = pneg %p1912
    $region54: #{shallow_convnet_forward.1} parent=5 // pred_check_branch
      %1915 = sbr.rel (%p1913) target = $region56
    $region55: #{shallow_convnet_forward.1} parent=5 // pred_region
      %s1916 = ssub.s32 %s13, 2
      // Predicated region
      $region57: #{shallow_convnet_forward.1} parent=55 // pred_check
        %p1917 = pneg %p194
      $region58: #{shallow_convnet_forward.1} parent=55 // pred_check_branch
        %1919 = sbr.rel (%p1917) target = $region60
      $region59: #{shallow_convnet_forward.1} parent=55 // pred_region
        %p1920 = scmp.lt.s32.totalorder %s19, 1
        %s1921 = scalar_select %p1920, %s19, 1
        %s1922 = smul.addr %s1921, 4
        %s1923 = scalar_lea.vmem %s7, %s1922
      $region60: #{shallow_convnet_forward.1} parent=55 // pred_fallthru
        _
    $region56: #{shallow_convnet_forward.1} parent=5 // pred_fallthru
      _
  $region6: #{shallow_convnet_forward.1} parent=0 // loop_footer
    %s17 = sadd.s32 1, %s13
  $region7: #{shallow_convnet_forward.1} parent=0 // loop_footer_branch
    %12 = sbr.rel target = $region3
  $region8: #{shallow_convnet_forward.1} parent=0 // loop_exit
    _

</llo_original>
